<compile_context>
chip_gen: v6e
topology: v6e:2x2x1
jax: 0.10.0
libtpu: 0.0.40
codegen_flags: <defaults>
</compile_context>

<pallas_src>
import functools

import jax
import jax.numpy as jnp
from jax import lax
from jax.experimental import pallas as pl
from jax.experimental.pallas import tpu as pltpu


# ----------------------------------------------------------------------------
# Pallas kernel: full forward pass
# ----------------------------------------------------------------------------
def _contrast_rnn_lstm_kernel(
    x_ref,        # (L*B, 1)          time-major flattened input column
    wpre_ref,     # (1, H)            linear_pre weight (in_dim = 1)
    bpre_ref,     # (1, H)            linear_pre bias
    wih_ref,      # (NL, H, 4H)       LSTM W_ih^T per layer
    whh_ref,      # (NL, H, 4H)       LSTM W_hh^T per layer
    b_ref,        # (NL, 1, 4H)       LSTM combined bias (b_ih + b_hh) per layer
    w1_ref,       # (1, H)            last1 weight as a row vector
    b1_ref,       # (1, 1)            last1 bias
    w2_ref,       # (L, OUT)          last2 weight^T
    b2_ref,       # (1, OUT)          last2 bias
    out_ref,      # (B, OUT)          output
    *,
    B, H, NL, L,
):
    f32 = jnp.float32

    # ---- linear_pre + ReLU in 2D, fully register-resident ----
    # (L*B, 1) * (1, H) + (1, H) -> (L*B, H); Dropout is identity in eval mode.
    xcol = x_ref[...]
    h_flat = jnp.maximum(xcol * wpre_ref[...] + bpre_ref[...], 0.0)   # (L*B, H)

    hs = []
    # ---- stacked LSTM (PyTorch gate order: i, f, g, o) ----
    for layer in range(NL):              # static unroll over layers
        wih_l = wih_ref[layer]           # (H, 4H)
        whh_l = whh_ref[layer]           # (H, 4H)
        bl = b_ref[layer]                # (1, 4H)

        # Hoisted input-hidden matmul + bias for all L timesteps: one dense
        # 2D MXU contraction, result stays as a value (never hits VMEM).
        xw = jnp.dot(h_flat, wih_l, preferred_element_type=f32) + bl   # (L*B, 4H)

        # h / c carried as values (vregs).
        h = jnp.zeros((B, H), f32)
        c = jnp.zeros((B, H), f32)
        hs = []
        for t in range(L):               # static unroll over time
            gates = xw[t * B:(t + 1) * B, :] + jnp.dot(
                h, whh_l, preferred_element_type=f32)                  # (B, 4H)
            # One sigmoid + one tanh on the full (B, 4H) tile, then slice.
            sg = jax.nn.sigmoid(gates)
            tg = jnp.tanh(gates)
            i_g = sg[:, 0 * H:1 * H]
            f_g = sg[:, 1 * H:2 * H]
            g_g = tg[:, 2 * H:3 * H]
            o_g = sg[:, 3 * H:4 * H]
            c = f_g * c + i_g * g_g
            h = o_g * jnp.tanh(c)
            hs.append(h)                 # stays in registers

        # Next layer's input, time-major flat (L*B, H); register-level concat.
        h_flat = jnp.concatenate(hs, axis=0)

    # ---- last1: Linear(H, 1) as per-step VPU lane reductions, (B, L) ----
    w1row = w1_ref[...]                                   # (1, H)
    y1_cols = [jnp.sum(hs[t] * w1row, axis=-1, keepdims=True) for t in range(L)]
    y1 = jnp.concatenate(y1_cols, axis=1) + b1_ref[...]   # (B, L)

    # ---- last2: Linear(L, OUT) over the sequence dim (no transpose needed) ----
    out_ref[...] = (
        jnp.dot(y1, w2_ref[...], preferred_element_type=f32) + b2_ref[...]
    )                                                     # (B, OUT)


# ----------------------------------------------------------------------------
# Wrapper
# ----------------------------------------------------------------------------
@jax.jit
def contrast_rnn_forward(x, params):
    B, L = x.shape
    H = params["wpre"].shape[1]
    NL = params["wih"].shape[0]
    OUT = params["w2"].shape[1]

    # Time-major, flattened to one (L*B, 1) column so linear_pre and the
    # hoisted input-hidden matmul are dense 2D ops.
    x_col = jnp.reshape(jnp.transpose(x), (L * B, 1))
    w1_row = jnp.reshape(params["w1"], (1, H))            # (H,1) -> (1,H)
    b3 = params["b"][:, None, :]                          # (NL, 1, 4H)

    kernel = functools.partial(_contrast_rnn_lstm_kernel, B=B, H=H, NL=NL, L=L)
    vmem = lambda: pl.BlockSpec(memory_space=pltpu.MemorySpace.VMEM)

    return pl.pallas_call(
        kernel,
        out_shape=jax.ShapeDtypeStruct((B, OUT), jnp.float32),
        in_specs=[vmem() for _ in range(10)],
        out_specs=vmem(),
        compiler_params=pltpu.CompilerParams(
            vmem_limit_bytes=32 * 1024 * 1024,
        ),
    )(
        x_col,
        params["wpre"], params["bpre"],
        params["wih"], params["whh"], b3,
        w1_row, params["b1"],
        params["w2"], params["b2"],
    )


# ----------------------------------------------------------------------------
# Pure-JAX reference (same math) for validation
# ----------------------------------------------------------------------------
def reference_forward(x, params):
    H = params["wpre"].shape[1]
    NL = params["wih"].shape[0]
    B, L = x.shape

    h = jnp.maximum(
        x[:, :, None] * params["wpre"][0][None, None, :] + params["bpre"][0], 0.0
    )  # (B, L, H)

    for layer in range(NL):
        wih, whh, b = params["wih"][layer], params["whh"][layer], params["b"][layer]

        def step(carry, x_t):
            h_prev, c_prev = carry
            gates = x_t @ wih + h_prev @ whh + b
            i_g = jax.nn.sigmoid(gates[:, 0 * H:1 * H])
            f_g = jax.nn.sigmoid(gates[:, 1 * H:2 * H])
            g_g = jnp.tanh(gates[:, 2 * H:3 * H])
            o_g = jax.nn.sigmoid(gates[:, 3 * H:4 * H])
            c_new = f_g * c_prev + i_g * g_g
            h_new = o_g * jnp.tanh(c_new)
            return (h_new, c_new), h_new

        init = (jnp.zeros((B, H), jnp.float32), jnp.zeros((B, H), jnp.float32))
        _, hs = lax.scan(step, init, jnp.swapaxes(h, 0, 1))
        h = jnp.swapaxes(hs, 0, 1)

    y1 = (h @ params["w1"])[:, :, 0] + params["b1"][0, 0]   # (B, L)
    return y1 @ params["w2"] + params["b2"]                  # (B, OUT)


# ----------------------------------------------------------------------------
# Deterministic parameter construction (PyTorch-default-style uniform init)
# ----------------------------------------------------------------------------
def make_params(key, in_dim, hid_dim, out_dim, l_x, num_layers):
    assert in_dim == 1, "forward does x.unsqueeze(2) => linear_pre in_dim must be 1"
    H, L, NL = hid_dim, l_x, num_layers
    ks = jax.random.split(key, 10)

    def u(k, shape, fan_in):
        bound = 1.0 / jnp.sqrt(float(fan_in))
        return jax.random.uniform(k, shape, jnp.float32, -bound, bound)

    return {
        "wpre": u(ks[0], (1, H), in_dim),          # linear_pre.weight (H,1) -> (1,H)
        "bpre": u(ks[1], (1, H), in_dim),
        "wih": u(ks[2], (NL, H, 4 * H), H),        # W_ih^T per layer
        "whh": u(ks[3], (NL, H, 4 * H), H),        # W_hh^T per layer
        "b": u(ks[4], (NL, 4 * H), H) + u(ks[5], (NL, 4 * H), H),  # b_ih + b_hh
        "w1": u(ks[6], (H, 1), H),                 # last1.weight^T
        "b1": u(ks[7], (1, 1), H),
        "w2": u(ks[8], (L, out_dim), L),           # last2.weight^T
        "b2": u(ks[9], (1, out_dim), L),
    }


if __name__ == "__main__":
    # Small config: rnn_style='LSTM', in_dim=1, hid_dim=32, out_dim=4, l_x=8, num_layers=2
    B, IN_DIM, HID, OUT, L, NL = 2, 1, 32, 4, 8, 2

    key = jax.random.PRNGKey(0)
    k_x, k_p = jax.random.split(key)
    x = jax.random.normal(k_x, (B, L), jnp.float32)
    params = make_params(k_p, IN_DIM, HID, OUT, L, NL)

    out = contrast_rnn_forward(x, params)
    out = jax.block_until_ready(out)

    ref = reference_forward(x, params)
    assert out.shape == (B, OUT), out.shape
    assert jnp.allclose(out, ref, atol=1e-4, rtol=1e-4), (out, ref)

    print("KERNEL_OK")
</pallas_src>

<mosaic_0001>
module attributes {stable_mosaic.version = 11 : i64} {
  func.func @_contrast_rnn_lstm_kernel(%arg0: memref<16x1xf32, #tpu.memory_space<vmem>>, %arg1: memref<1x32xf32, #tpu.memory_space<vmem>>, %arg2: memref<1x32xf32, #tpu.memory_space<vmem>>, %arg3: memref<2x32x128xf32, #tpu.memory_space<vmem>>, %arg4: memref<2x32x128xf32, #tpu.memory_space<vmem>>, %arg5: memref<2x1x128xf32, #tpu.memory_space<vmem>>, %arg6: memref<1x32xf32, #tpu.memory_space<vmem>>, %arg7: memref<1x1xf32, #tpu.memory_space<vmem>>, %arg8: memref<8x4xf32, #tpu.memory_space<vmem>>, %arg9: memref<1x4xf32, #tpu.memory_space<vmem>>, %arg10: memref<2x4xf32, #tpu.memory_space<vmem>>) attributes {dimension_semantics = [], scalar_prefetch = 0 : i64, scratch_operands = 0 : i64, tpu.core_type = #tpu.core_type<tc>} {
    %c0 = arith.constant 0 : index
    %c0_0 = arith.constant 0 : index
    %0 = vector.load %arg0[%c0, %c0_0] : memref<16x1xf32, #tpu.memory_space<vmem>>, vector<16x1xf32>
    %c0_1 = arith.constant 0 : index
    %c0_2 = arith.constant 0 : index
    %1 = vector.load %arg1[%c0_1, %c0_2] : memref<1x32xf32, #tpu.memory_space<vmem>>, vector<1x32xf32>
    %2 = vector.broadcast %0 : vector<16x1xf32> to vector<16x32xf32>
    %3 = vector.broadcast %1 : vector<1x32xf32> to vector<16x32xf32>
    %4 = arith.mulf %2, %3 : vector<16x32xf32>
    %c0_3 = arith.constant 0 : index
    %c0_4 = arith.constant 0 : index
    %5 = vector.load %arg2[%c0_3, %c0_4] : memref<1x32xf32, #tpu.memory_space<vmem>>, vector<1x32xf32>
    %6 = vector.broadcast %5 : vector<1x32xf32> to vector<16x32xf32>
    %7 = arith.addf %4, %6 : vector<16x32xf32>
    %cst = arith.constant 0.000000e+00 : f32
    %8 = vector.broadcast %cst : f32 to vector<16x32xf32>
    %9 = arith.maximumf %7, %8 : vector<16x32xf32>
    %c0_5 = arith.constant 0 : index
    %c0_6 = arith.constant 0 : index
    %c0_7 = arith.constant 0 : index
    %10 = vector.load %arg3[%c0_5, %c0_6, %c0_7] : memref<2x32x128xf32, #tpu.memory_space<vmem>>, vector<1x32x128xf32>
    %11 = vector.shape_cast %10 : vector<1x32x128xf32> to vector<32x128xf32>
    %c0_8 = arith.constant 0 : index
    %c0_9 = arith.constant 0 : index
    %c0_10 = arith.constant 0 : index
    %12 = vector.load %arg4[%c0_8, %c0_9, %c0_10] : memref<2x32x128xf32, #tpu.memory_space<vmem>>, vector<1x32x128xf32>
    %13 = vector.shape_cast %12 : vector<1x32x128xf32> to vector<32x128xf32>
    %c0_11 = arith.constant 0 : index
    %c0_12 = arith.constant 0 : index
    %c0_13 = arith.constant 0 : index
    %14 = vector.load %arg5[%c0_11, %c0_12, %c0_13] : memref<2x1x128xf32, #tpu.memory_space<vmem>>, vector<1x1x128xf32>
    %15 = vector.shape_cast %14 : vector<1x1x128xf32> to vector<1x128xf32>
    %cst_14 = arith.constant dense<0.000000e+00> : vector<16x128xf32>
    %16 = tpu.matmul %9, %11, %cst_14 {dimension_numbers = #tpu.dot_dimension_numbers<[1], [0], [0], [1], [0, 0, 1, 1], [], []>} : vector<16x32xf32>, vector<32x128xf32>, vector<16x128xf32> -> vector<16x128xf32>
    %17 = vector.broadcast %15 : vector<1x128xf32> to vector<16x128xf32>
    %18 = arith.addf %16, %17 : vector<16x128xf32>
    %cst_15 = arith.constant 0.000000e+00 : f32
    %19 = vector.broadcast %cst_15 : f32 to vector<2x32xf32>
    %cst_16 = arith.constant 0.000000e+00 : f32
    %20 = vector.broadcast %cst_16 : f32 to vector<2x32xf32>
    %21 = vector.extract_strided_slice %18 {offsets = [0, 0], sizes = [2, 128], strides = [1, 1]} : vector<16x128xf32> to vector<2x128xf32>
    %cst_17 = arith.constant dense<0.000000e+00> : vector<2x128xf32>
    %22 = tpu.matmul %19, %13, %cst_17 {dimension_numbers = #tpu.dot_dimension_numbers<[1], [0], [0], [1], [0, 0, 1, 1], [], []>} : vector<2x32xf32>, vector<32x128xf32>, vector<2x128xf32> -> vector<2x128xf32>
    %23 = arith.addf %21, %22 : vector<2x128xf32>
    %24 = arith.negf %23 : vector<2x128xf32>
    %25 = math.exp %24 : vector<2x128xf32>
    %cst_18 = arith.constant 1.000000e+00 : f32
    %26 = vector.broadcast %cst_18 : f32 to vector<2x128xf32>
    %27 = arith.addf %26, %25 : vector<2x128xf32>
    %28 = arith.divf %26, %27 : vector<2x128xf32>
    %29 = math.tanh %23 : vector<2x128xf32>
    %30 = vector.extract_strided_slice %28 {offsets = [0, 0], sizes = [2, 32], strides = [1, 1]} : vector<2x128xf32> to vector<2x32xf32>
    %31 = vector.extract_strided_slice %28 {offsets = [0, 32], sizes = [2, 32], strides = [1, 1]} : vector<2x128xf32> to vector<2x32xf32>
    %32 = vector.extract_strided_slice %29 {offsets = [0, 64], sizes = [2, 32], strides = [1, 1]} : vector<2x128xf32> to vector<2x32xf32>
    %33 = vector.extract_strided_slice %28 {offsets = [0, 96], sizes = [2, 32], strides = [1, 1]} : vector<2x128xf32> to vector<2x32xf32>
    %34 = arith.mulf %31, %20 : vector<2x32xf32>
    %35 = arith.mulf %30, %32 : vector<2x32xf32>
    %36 = arith.addf %34, %35 : vector<2x32xf32>
    %37 = math.tanh %36 : vector<2x32xf32>
    %38 = arith.mulf %33, %37 : vector<2x32xf32>
    %39 = vector.extract_strided_slice %18 {offsets = [2, 0], sizes = [2, 128], strides = [1, 1]} : vector<16x128xf32> to vector<2x128xf32>
    %cst_19 = arith.constant dense<0.000000e+00> : vector<2x128xf32>
    %40 = tpu.matmul %38, %13, %cst_19 {dimension_numbers = #tpu.dot_dimension_numbers<[1], [0], [0], [1], [0, 0, 1, 1], [], []>} : vector<2x32xf32>, vector<32x128xf32>, vector<2x128xf32> -> vector<2x128xf32>
    %41 = arith.addf %39, %40 : vector<2x128xf32>
    %42 = arith.negf %41 : vector<2x128xf32>
    %43 = math.exp %42 : vector<2x128xf32>
    %cst_20 = arith.constant 1.000000e+00 : f32
    %44 = vector.broadcast %cst_20 : f32 to vector<2x128xf32>
    %45 = arith.addf %44, %43 : vector<2x128xf32>
    %46 = arith.divf %44, %45 : vector<2x128xf32>
    %47 = math.tanh %41 : vector<2x128xf32>
    %48 = vector.extract_strided_slice %46 {offsets = [0, 0], sizes = [2, 32], strides = [1, 1]} : vector<2x128xf32> to vector<2x32xf32>
    %49 = vector.extract_strided_slice %46 {offsets = [0, 32], sizes = [2, 32], strides = [1, 1]} : vector<2x128xf32> to vector<2x32xf32>
    %50 = vector.extract_strided_slice %47 {offsets = [0, 64], sizes = [2, 32], strides = [1, 1]} : vector<2x128xf32> to vector<2x32xf32>
    %51 = vector.extract_strided_slice %46 {offsets = [0, 96], sizes = [2, 32], strides = [1, 1]} : vector<2x128xf32> to vector<2x32xf32>
    %52 = arith.mulf %49, %36 : vector<2x32xf32>
    %53 = arith.mulf %48, %50 : vector<2x32xf32>
    %54 = arith.addf %52, %53 : vector<2x32xf32>
    %55 = math.tanh %54 : vector<2x32xf32>
    %56 = arith.mulf %51, %55 : vector<2x32xf32>
    %57 = vector.extract_strided_slice %18 {offsets = [4, 0], sizes = [2, 128], strides = [1, 1]} : vector<16x128xf32> to vector<2x128xf32>
    %cst_21 = arith.constant dense<0.000000e+00> : vector<2x128xf32>
    %58 = tpu.matmul %56, %13, %cst_21 {dimension_numbers = #tpu.dot_dimension_numbers<[1], [0], [0], [1], [0, 0, 1, 1], [], []>} : vector<2x32xf32>, vector<32x128xf32>, vector<2x128xf32> -> vector<2x128xf32>
    %59 = arith.addf %57, %58 : vector<2x128xf32>
    %60 = arith.negf %59 : vector<2x128xf32>
    %61 = math.exp %60 : vector<2x128xf32>
    %cst_22 = arith.constant 1.000000e+00 : f32
    %62 = vector.broadcast %cst_22 : f32 to vector<2x128xf32>
    %63 = arith.addf %62, %61 : vector<2x128xf32>
    %64 = arith.divf %62, %63 : vector<2x128xf32>
    %65 = math.tanh %59 : vector<2x128xf32>
    %66 = vector.extract_strided_slice %64 {offsets = [0, 0], sizes = [2, 32], strides = [1, 1]} : vector<2x128xf32> to vector<2x32xf32>
    %67 = vector.extract_strided_slice %64 {offsets = [0, 32], sizes = [2, 32], strides = [1, 1]} : vector<2x128xf32> to vector<2x32xf32>
    %68 = vector.extract_strided_slice %65 {offsets = [0, 64], sizes = [2, 32], strides = [1, 1]} : vector<2x128xf32> to vector<2x32xf32>
    %69 = vector.extract_strided_slice %64 {offsets = [0, 96], sizes = [2, 32], strides = [1, 1]} : vector<2x128xf32> to vector<2x32xf32>
    %70 = arith.mulf %67, %54 : vector<2x32xf32>
    %71 = arith.mulf %66, %68 : vector<2x32xf32>
    %72 = arith.addf %70, %71 : vector<2x32xf32>
    %73 = math.tanh %72 : vector<2x32xf32>
    %74 = arith.mulf %69, %73 : vector<2x32xf32>
    %75 = vector.extract_strided_slice %18 {offsets = [6, 0], sizes = [2, 128], strides = [1, 1]} : vector<16x128xf32> to vector<2x128xf32>
    %cst_23 = arith.constant dense<0.000000e+00> : vector<2x128xf32>
    %76 = tpu.matmul %74, %13, %cst_23 {dimension_numbers = #tpu.dot_dimension_numbers<[1], [0], [0], [1], [0, 0, 1, 1], [], []>} : vector<2x32xf32>, vector<32x128xf32>, vector<2x128xf32> -> vector<2x128xf32>
    %77 = arith.addf %75, %76 : vector<2x128xf32>
    %78 = arith.negf %77 : vector<2x128xf32>
    %79 = math.exp %78 : vector<2x128xf32>
    %cst_24 = arith.constant 1.000000e+00 : f32
    %80 = vector.broadcast %cst_24 : f32 to vector<2x128xf32>
    %81 = arith.addf %80, %79 : vector<2x128xf32>
    %82 = arith.divf %80, %81 : vector<2x128xf32>
    %83 = math.tanh %77 : vector<2x128xf32>
    %84 = vector.extract_strided_slice %82 {offsets = [0, 0], sizes = [2, 32], strides = [1, 1]} : vector<2x128xf32> to vector<2x32xf32>
    %85 = vector.extract_strided_slice %82 {offsets = [0, 32], sizes = [2, 32], strides = [1, 1]} : vector<2x128xf32> to vector<2x32xf32>
    %86 = vector.extract_strided_slice %83 {offsets = [0, 64], sizes = [2, 32], strides = [1, 1]} : vector<2x128xf32> to vector<2x32xf32>
    %87 = vector.extract_strided_slice %82 {offsets = [0, 96], sizes = [2, 32], strides = [1, 1]} : vector<2x128xf32> to vector<2x32xf32>
    %88 = arith.mulf %85, %72 : vector<2x32xf32>
    %89 = arith.mulf %84, %86 : vector<2x32xf32>
    %90 = arith.addf %88, %89 : vector<2x32xf32>
    %91 = math.tanh %90 : vector<2x32xf32>
    %92 = arith.mulf %87, %91 : vector<2x32xf32>
    %93 = vector.extract_strided_slice %18 {offsets = [8, 0], sizes = [2, 128], strides = [1, 1]} : vector<16x128xf32> to vector<2x128xf32>
    %cst_25 = arith.constant dense<0.000000e+00> : vector<2x128xf32>
    %94 = tpu.matmul %92, %13, %cst_25 {dimension_numbers = #tpu.dot_dimension_numbers<[1], [0], [0], [1], [0, 0, 1, 1], [], []>} : vector<2x32xf32>, vector<32x128xf32>, vector<2x128xf32> -> vector<2x128xf32>
    %95 = arith.addf %93, %94 : vector<2x128xf32>
    %96 = arith.negf %95 : vector<2x128xf32>
    %97 = math.exp %96 : vector<2x128xf32>
    %cst_26 = arith.constant 1.000000e+00 : f32
    %98 = vector.broadcast %cst_26 : f32 to vector<2x128xf32>
    %99 = arith.addf %98, %97 : vector<2x128xf32>
    %100 = arith.divf %98, %99 : vector<2x128xf32>
    %101 = math.tanh %95 : vector<2x128xf32>
    %102 = vector.extract_strided_slice %100 {offsets = [0, 0], sizes = [2, 32], strides = [1, 1]} : vector<2x128xf32> to vector<2x32xf32>
    %103 = vector.extract_strided_slice %100 {offsets = [0, 32], sizes = [2, 32], strides = [1, 1]} : vector<2x128xf32> to vector<2x32xf32>
    %104 = vector.extract_strided_slice %101 {offsets = [0, 64], sizes = [2, 32], strides = [1, 1]} : vector<2x128xf32> to vector<2x32xf32>
    %105 = vector.extract_strided_slice %100 {offsets = [0, 96], sizes = [2, 32], strides = [1, 1]} : vector<2x128xf32> to vector<2x32xf32>
    %106 = arith.mulf %103, %90 : vector<2x32xf32>
    %107 = arith.mulf %102, %104 : vector<2x32xf32>
    %108 = arith.addf %106, %107 : vector<2x32xf32>
    %109 = math.tanh %108 : vector<2x32xf32>
    %110 = arith.mulf %105, %109 : vector<2x32xf32>
    %111 = vector.extract_strided_slice %18 {offsets = [10, 0], sizes = [2, 128], strides = [1, 1]} : vector<16x128xf32> to vector<2x128xf32>
    %cst_27 = arith.constant dense<0.000000e+00> : vector<2x128xf32>
    %112 = tpu.matmul %110, %13, %cst_27 {dimension_numbers = #tpu.dot_dimension_numbers<[1], [0], [0], [1], [0, 0, 1, 1], [], []>} : vector<2x32xf32>, vector<32x128xf32>, vector<2x128xf32> -> vector<2x128xf32>
    %113 = arith.addf %111, %112 : vector<2x128xf32>
    %114 = arith.negf %113 : vector<2x128xf32>
    %115 = math.exp %114 : vector<2x128xf32>
    %cst_28 = arith.constant 1.000000e+00 : f32
    %116 = vector.broadcast %cst_28 : f32 to vector<2x128xf32>
    %117 = arith.addf %116, %115 : vector<2x128xf32>
    %118 = arith.divf %116, %117 : vector<2x128xf32>
    %119 = math.tanh %113 : vector<2x128xf32>
    %120 = vector.extract_strided_slice %118 {offsets = [0, 0], sizes = [2, 32], strides = [1, 1]} : vector<2x128xf32> to vector<2x32xf32>
    %121 = vector.extract_strided_slice %118 {offsets = [0, 32], sizes = [2, 32], strides = [1, 1]} : vector<2x128xf32> to vector<2x32xf32>
    %122 = vector.extract_strided_slice %119 {offsets = [0, 64], sizes = [2, 32], strides = [1, 1]} : vector<2x128xf32> to vector<2x32xf32>
    %123 = vector.extract_strided_slice %118 {offsets = [0, 96], sizes = [2, 32], strides = [1, 1]} : vector<2x128xf32> to vector<2x32xf32>
    %124 = arith.mulf %121, %108 : vector<2x32xf32>
    %125 = arith.mulf %120, %122 : vector<2x32xf32>
    %126 = arith.addf %124, %125 : vector<2x32xf32>
    %127 = math.tanh %126 : vector<2x32xf32>
    %128 = arith.mulf %123, %127 : vector<2x32xf32>
    %129 = vector.extract_strided_slice %18 {offsets = [12, 0], sizes = [2, 128], strides = [1, 1]} : vector<16x128xf32> to vector<2x128xf32>
    %cst_29 = arith.constant dense<0.000000e+00> : vector<2x128xf32>
    %130 = tpu.matmul %128, %13, %cst_29 {dimension_numbers = #tpu.dot_dimension_numbers<[1], [0], [0], [1], [0, 0, 1, 1], [], []>} : vector<2x32xf32>, vector<32x128xf32>, vector<2x128xf32> -> vector<2x128xf32>
    %131 = arith.addf %129, %130 : vector<2x128xf32>
    %132 = arith.negf %131 : vector<2x128xf32>
    %133 = math.exp %132 : vector<2x128xf32>
    %cst_30 = arith.constant 1.000000e+00 : f32
    %134 = vector.broadcast %cst_30 : f32 to vector<2x128xf32>
    %135 = arith.addf %134, %133 : vector<2x128xf32>
    %136 = arith.divf %134, %135 : vector<2x128xf32>
    %137 = math.tanh %131 : vector<2x128xf32>
    %138 = vector.extract_strided_slice %136 {offsets = [0, 0], sizes = [2, 32], strides = [1, 1]} : vector<2x128xf32> to vector<2x32xf32>
    %139 = vector.extract_strided_slice %136 {offsets = [0, 32], sizes = [2, 32], strides = [1, 1]} : vector<2x128xf32> to vector<2x32xf32>
    %140 = vector.extract_strided_slice %137 {offsets = [0, 64], sizes = [2, 32], strides = [1, 1]} : vector<2x128xf32> to vector<2x32xf32>
    %141 = vector.extract_strided_slice %136 {offsets = [0, 96], sizes = [2, 32], strides = [1, 1]} : vector<2x128xf32> to vector<2x32xf32>
    %142 = arith.mulf %139, %126 : vector<2x32xf32>
    %143 = arith.mulf %138, %140 : vector<2x32xf32>
    %144 = arith.addf %142, %143 : vector<2x32xf32>
    %145 = math.tanh %144 : vector<2x32xf32>
    %146 = arith.mulf %141, %145 : vector<2x32xf32>
    %147 = vector.extract_strided_slice %18 {offsets = [14, 0], sizes = [2, 128], strides = [1, 1]} : vector<16x128xf32> to vector<2x128xf32>
    %cst_31 = arith.constant dense<0.000000e+00> : vector<2x128xf32>
    %148 = tpu.matmul %146, %13, %cst_31 {dimension_numbers = #tpu.dot_dimension_numbers<[1], [0], [0], [1], [0, 0, 1, 1], [], []>} : vector<2x32xf32>, vector<32x128xf32>, vector<2x128xf32> -> vector<2x128xf32>
    %149 = arith.addf %147, %148 : vector<2x128xf32>
    %150 = arith.negf %149 : vector<2x128xf32>
    %151 = math.exp %150 : vector<2x128xf32>
    %cst_32 = arith.constant 1.000000e+00 : f32
    %152 = vector.broadcast %cst_32 : f32 to vector<2x128xf32>
    %153 = arith.addf %152, %151 : vector<2x128xf32>
    %154 = arith.divf %152, %153 : vector<2x128xf32>
    %155 = math.tanh %149 : vector<2x128xf32>
    %156 = vector.extract_strided_slice %154 {offsets = [0, 0], sizes = [2, 32], strides = [1, 1]} : vector<2x128xf32> to vector<2x32xf32>
    %157 = vector.extract_strided_slice %154 {offsets = [0, 32], sizes = [2, 32], strides = [1, 1]} : vector<2x128xf32> to vector<2x32xf32>
    %158 = vector.extract_strided_slice %155 {offsets = [0, 64], sizes = [2, 32], strides = [1, 1]} : vector<2x128xf32> to vector<2x32xf32>
    %159 = vector.extract_strided_slice %154 {offsets = [0, 96], sizes = [2, 32], strides = [1, 1]} : vector<2x128xf32> to vector<2x32xf32>
    %160 = arith.mulf %157, %144 : vector<2x32xf32>
    %161 = arith.mulf %156, %158 : vector<2x32xf32>
    %162 = arith.addf %160, %161 : vector<2x32xf32>
    %163 = math.tanh %162 : vector<2x32xf32>
    %164 = arith.mulf %159, %163 : vector<2x32xf32>
    %165 = tpu.concatenate %38, %56, %74, %92, %110, %128, %146, %164 in 0 : vector<2x32xf32>, vector<2x32xf32>, vector<2x32xf32>, vector<2x32xf32>, vector<2x32xf32>, vector<2x32xf32>, vector<2x32xf32>, vector<2x32xf32> -> vector<16x32xf32>
    %c1 = arith.constant 1 : index
    %c0_33 = arith.constant 0 : index
    %c0_34 = arith.constant 0 : index
    %166 = vector.load %arg3[%c1, %c0_33, %c0_34] : memref<2x32x128xf32, #tpu.memory_space<vmem>>, vector<1x32x128xf32>
    %167 = vector.shape_cast %166 : vector<1x32x128xf32> to vector<32x128xf32>
    %c1_35 = arith.constant 1 : index
    %c0_36 = arith.constant 0 : index
    %c0_37 = arith.constant 0 : index
    %168 = vector.load %arg4[%c1_35, %c0_36, %c0_37] : memref<2x32x128xf32, #tpu.memory_space<vmem>>, vector<1x32x128xf32>
    %169 = vector.shape_cast %168 : vector<1x32x128xf32> to vector<32x128xf32>
    %c1_38 = arith.constant 1 : index
    %c0_39 = arith.constant 0 : index
    %c0_40 = arith.constant 0 : index
    %170 = vector.load %arg5[%c1_38, %c0_39, %c0_40] : memref<2x1x128xf32, #tpu.memory_space<vmem>>, vector<1x1x128xf32>
    %171 = vector.shape_cast %170 : vector<1x1x128xf32> to vector<1x128xf32>
    %cst_41 = arith.constant dense<0.000000e+00> : vector<16x128xf32>
    %172 = tpu.matmul %165, %167, %cst_41 {dimension_numbers = #tpu.dot_dimension_numbers<[1], [0], [0], [1], [0, 0, 1, 1], [], []>} : vector<16x32xf32>, vector<32x128xf32>, vector<16x128xf32> -> vector<16x128xf32>
    %173 = vector.broadcast %171 : vector<1x128xf32> to vector<16x128xf32>
    %174 = arith.addf %172, %173 : vector<16x128xf32>
    %cst_42 = arith.constant 0.000000e+00 : f32
    %175 = vector.broadcast %cst_42 : f32 to vector<2x32xf32>
    %cst_43 = arith.constant 0.000000e+00 : f32
    %176 = vector.broadcast %cst_43 : f32 to vector<2x32xf32>
    %177 = vector.extract_strided_slice %174 {offsets = [0, 0], sizes = [2, 128], strides = [1, 1]} : vector<16x128xf32> to vector<2x128xf32>
    %cst_44 = arith.constant dense<0.000000e+00> : vector<2x128xf32>
    %178 = tpu.matmul %175, %169, %cst_44 {dimension_numbers = #tpu.dot_dimension_numbers<[1], [0], [0], [1], [0, 0, 1, 1], [], []>} : vector<2x32xf32>, vector<32x128xf32>, vector<2x128xf32> -> vector<2x128xf32>
    %179 = arith.addf %177, %178 : vector<2x128xf32>
    %180 = arith.negf %179 : vector<2x128xf32>
    %181 = math.exp %180 : vector<2x128xf32>
    %cst_45 = arith.constant 1.000000e+00 : f32
    %182 = vector.broadcast %cst_45 : f32 to vector<2x128xf32>
    %183 = arith.addf %182, %181 : vector<2x128xf32>
    %184 = arith.divf %182, %183 : vector<2x128xf32>
    %185 = math.tanh %179 : vector<2x128xf32>
    %186 = vector.extract_strided_slice %184 {offsets = [0, 0], sizes = [2, 32], strides = [1, 1]} : vector<2x128xf32> to vector<2x32xf32>
    %187 = vector.extract_strided_slice %184 {offsets = [0, 32], sizes = [2, 32], strides = [1, 1]} : vector<2x128xf32> to vector<2x32xf32>
    %188 = vector.extract_strided_slice %185 {offsets = [0, 64], sizes = [2, 32], strides = [1, 1]} : vector<2x128xf32> to vector<2x32xf32>
    %189 = vector.extract_strided_slice %184 {offsets = [0, 96], sizes = [2, 32], strides = [1, 1]} : vector<2x128xf32> to vector<2x32xf32>
    %190 = arith.mulf %187, %176 : vector<2x32xf32>
    %191 = arith.mulf %186, %188 : vector<2x32xf32>
    %192 = arith.addf %190, %191 : vector<2x32xf32>
    %193 = math.tanh %192 : vector<2x32xf32>
    %194 = arith.mulf %189, %193 : vector<2x32xf32>
    %195 = vector.extract_strided_slice %174 {offsets = [2, 0], sizes = [2, 128], strides = [1, 1]} : vector<16x128xf32> to vector<2x128xf32>
    %cst_46 = arith.constant dense<0.000000e+00> : vector<2x128xf32>
    %196 = tpu.matmul %194, %169, %cst_46 {dimension_numbers = #tpu.dot_dimension_numbers<[1], [0], [0], [1], [0, 0, 1, 1], [], []>} : vector<2x32xf32>, vector<32x128xf32>, vector<2x128xf32> -> vector<2x128xf32>
    %197 = arith.addf %195, %196 : vector<2x128xf32>
    %198 = arith.negf %197 : vector<2x128xf32>
    %199 = math.exp %198 : vector<2x128xf32>
    %cst_47 = arith.constant 1.000000e+00 : f32
    %200 = vector.broadcast %cst_47 : f32 to vector<2x128xf32>
    %201 = arith.addf %200, %199 : vector<2x128xf32>
    %202 = arith.divf %200, %201 : vector<2x128xf32>
    %203 = math.tanh %197 : vector<2x128xf32>
    %204 = vector.extract_strided_slice %202 {offsets = [0, 0], sizes = [2, 32], strides = [1, 1]} : vector<2x128xf32> to vector<2x32xf32>
    %205 = vector.extract_strided_slice %202 {offsets = [0, 32], sizes = [2, 32], strides = [1, 1]} : vector<2x128xf32> to vector<2x32xf32>
    %206 = vector.extract_strided_slice %203 {offsets = [0, 64], sizes = [2, 32], strides = [1, 1]} : vector<2x128xf32> to vector<2x32xf32>
    %207 = vector.extract_strided_slice %202 {offsets = [0, 96], sizes = [2, 32], strides = [1, 1]} : vector<2x128xf32> to vector<2x32xf32>
    %208 = arith.mulf %205, %192 : vector<2x32xf32>
    %209 = arith.mulf %204, %206 : vector<2x32xf32>
    %210 = arith.addf %208, %209 : vector<2x32xf32>
    %211 = math.tanh %210 : vector<2x32xf32>
    %212 = arith.mulf %207, %211 : vector<2x32xf32>
    %213 = vector.extract_strided_slice %174 {offsets = [4, 0], sizes = [2, 128], strides = [1, 1]} : vector<16x128xf32> to vector<2x128xf32>
    %cst_48 = arith.constant dense<0.000000e+00> : vector<2x128xf32>
    %214 = tpu.matmul %212, %169, %cst_48 {dimension_numbers = #tpu.dot_dimension_numbers<[1], [0], [0], [1], [0, 0, 1, 1], [], []>} : vector<2x32xf32>, vector<32x128xf32>, vector<2x128xf32> -> vector<2x128xf32>
    %215 = arith.addf %213, %214 : vector<2x128xf32>
    %216 = arith.negf %215 : vector<2x128xf32>
    %217 = math.exp %216 : vector<2x128xf32>
    %cst_49 = arith.constant 1.000000e+00 : f32
    %218 = vector.broadcast %cst_49 : f32 to vector<2x128xf32>
    %219 = arith.addf %218, %217 : vector<2x128xf32>
    %220 = arith.divf %218, %219 : vector<2x128xf32>
    %221 = math.tanh %215 : vector<2x128xf32>
    %222 = vector.extract_strided_slice %220 {offsets = [0, 0], sizes = [2, 32], strides = [1, 1]} : vector<2x128xf32> to vector<2x32xf32>
    %223 = vector.extract_strided_slice %220 {offsets = [0, 32], sizes = [2, 32], strides = [1, 1]} : vector<2x128xf32> to vector<2x32xf32>
    %224 = vector.extract_strided_slice %221 {offsets = [0, 64], sizes = [2, 32], strides = [1, 1]} : vector<2x128xf32> to vector<2x32xf32>
    %225 = vector.extract_strided_slice %220 {offsets = [0, 96], sizes = [2, 32], strides = [1, 1]} : vector<2x128xf32> to vector<2x32xf32>
    %226 = arith.mulf %223, %210 : vector<2x32xf32>
    %227 = arith.mulf %222, %224 : vector<2x32xf32>
    %228 = arith.addf %226, %227 : vector<2x32xf32>
    %229 = math.tanh %228 : vector<2x32xf32>
    %230 = arith.mulf %225, %229 : vector<2x32xf32>
    %231 = vector.extract_strided_slice %174 {offsets = [6, 0], sizes = [2, 128], strides = [1, 1]} : vector<16x128xf32> to vector<2x128xf32>
    %cst_50 = arith.constant dense<0.000000e+00> : vector<2x128xf32>
    %232 = tpu.matmul %230, %169, %cst_50 {dimension_numbers = #tpu.dot_dimension_numbers<[1], [0], [0], [1], [0, 0, 1, 1], [], []>} : vector<2x32xf32>, vector<32x128xf32>, vector<2x128xf32> -> vector<2x128xf32>
    %233 = arith.addf %231, %232 : vector<2x128xf32>
    %234 = arith.negf %233 : vector<2x128xf32>
    %235 = math.exp %234 : vector<2x128xf32>
    %cst_51 = arith.constant 1.000000e+00 : f32
    %236 = vector.broadcast %cst_51 : f32 to vector<2x128xf32>
    %237 = arith.addf %236, %235 : vector<2x128xf32>
    %238 = arith.divf %236, %237 : vector<2x128xf32>
    %239 = math.tanh %233 : vector<2x128xf32>
    %240 = vector.extract_strided_slice %238 {offsets = [0, 0], sizes = [2, 32], strides = [1, 1]} : vector<2x128xf32> to vector<2x32xf32>
    %241 = vector.extract_strided_slice %238 {offsets = [0, 32], sizes = [2, 32], strides = [1, 1]} : vector<2x128xf32> to vector<2x32xf32>
    %242 = vector.extract_strided_slice %239 {offsets = [0, 64], sizes = [2, 32], strides = [1, 1]} : vector<2x128xf32> to vector<2x32xf32>
    %243 = vector.extract_strided_slice %238 {offsets = [0, 96], sizes = [2, 32], strides = [1, 1]} : vector<2x128xf32> to vector<2x32xf32>
    %244 = arith.mulf %241, %228 : vector<2x32xf32>
    %245 = arith.mulf %240, %242 : vector<2x32xf32>
    %246 = arith.addf %244, %245 : vector<2x32xf32>
    %247 = math.tanh %246 : vector<2x32xf32>
    %248 = arith.mulf %243, %247 : vector<2x32xf32>
    %249 = vector.extract_strided_slice %174 {offsets = [8, 0], sizes = [2, 128], strides = [1, 1]} : vector<16x128xf32> to vector<2x128xf32>
    %cst_52 = arith.constant dense<0.000000e+00> : vector<2x128xf32>
    %250 = tpu.matmul %248, %169, %cst_52 {dimension_numbers = #tpu.dot_dimension_numbers<[1], [0], [0], [1], [0, 0, 1, 1], [], []>} : vector<2x32xf32>, vector<32x128xf32>, vector<2x128xf32> -> vector<2x128xf32>
    %251 = arith.addf %249, %250 : vector<2x128xf32>
    %252 = arith.negf %251 : vector<2x128xf32>
    %253 = math.exp %252 : vector<2x128xf32>
    %cst_53 = arith.constant 1.000000e+00 : f32
    %254 = vector.broadcast %cst_53 : f32 to vector<2x128xf32>
    %255 = arith.addf %254, %253 : vector<2x128xf32>
    %256 = arith.divf %254, %255 : vector<2x128xf32>
    %257 = math.tanh %251 : vector<2x128xf32>
    %258 = vector.extract_strided_slice %256 {offsets = [0, 0], sizes = [2, 32], strides = [1, 1]} : vector<2x128xf32> to vector<2x32xf32>
    %259 = vector.extract_strided_slice %256 {offsets = [0, 32], sizes = [2, 32], strides = [1, 1]} : vector<2x128xf32> to vector<2x32xf32>
    %260 = vector.extract_strided_slice %257 {offsets = [0, 64], sizes = [2, 32], strides = [1, 1]} : vector<2x128xf32> to vector<2x32xf32>
    %261 = vector.extract_strided_slice %256 {offsets = [0, 96], sizes = [2, 32], strides = [1, 1]} : vector<2x128xf32> to vector<2x32xf32>
    %262 = arith.mulf %259, %246 : vector<2x32xf32>
    %263 = arith.mulf %258, %260 : vector<2x32xf32>
    %264 = arith.addf %262, %263 : vector<2x32xf32>
    %265 = math.tanh %264 : vector<2x32xf32>
    %266 = arith.mulf %261, %265 : vector<2x32xf32>
    %267 = vector.extract_strided_slice %174 {offsets = [10, 0], sizes = [2, 128], strides = [1, 1]} : vector<16x128xf32> to vector<2x128xf32>
    %cst_54 = arith.constant dense<0.000000e+00> : vector<2x128xf32>
    %268 = tpu.matmul %266, %169, %cst_54 {dimension_numbers = #tpu.dot_dimension_numbers<[1], [0], [0], [1], [0, 0, 1, 1], [], []>} : vector<2x32xf32>, vector<32x128xf32>, vector<2x128xf32> -> vector<2x128xf32>
    %269 = arith.addf %267, %268 : vector<2x128xf32>
    %270 = arith.negf %269 : vector<2x128xf32>
    %271 = math.exp %270 : vector<2x128xf32>
    %cst_55 = arith.constant 1.000000e+00 : f32
    %272 = vector.broadcast %cst_55 : f32 to vector<2x128xf32>
    %273 = arith.addf %272, %271 : vector<2x128xf32>
    %274 = arith.divf %272, %273 : vector<2x128xf32>
    %275 = math.tanh %269 : vector<2x128xf32>
    %276 = vector.extract_strided_slice %274 {offsets = [0, 0], sizes = [2, 32], strides = [1, 1]} : vector<2x128xf32> to vector<2x32xf32>
    %277 = vector.extract_strided_slice %274 {offsets = [0, 32], sizes = [2, 32], strides = [1, 1]} : vector<2x128xf32> to vector<2x32xf32>
    %278 = vector.extract_strided_slice %275 {offsets = [0, 64], sizes = [2, 32], strides = [1, 1]} : vector<2x128xf32> to vector<2x32xf32>
    %279 = vector.extract_strided_slice %274 {offsets = [0, 96], sizes = [2, 32], strides = [1, 1]} : vector<2x128xf32> to vector<2x32xf32>
    %280 = arith.mulf %277, %264 : vector<2x32xf32>
    %281 = arith.mulf %276, %278 : vector<2x32xf32>
    %282 = arith.addf %280, %281 : vector<2x32xf32>
    %283 = math.tanh %282 : vector<2x32xf32>
    %284 = arith.mulf %279, %283 : vector<2x32xf32>
    %285 = vector.extract_strided_slice %174 {offsets = [12, 0], sizes = [2, 128], strides = [1, 1]} : vector<16x128xf32> to vector<2x128xf32>
    %cst_56 = arith.constant dense<0.000000e+00> : vector<2x128xf32>
    %286 = tpu.matmul %284, %169, %cst_56 {dimension_numbers = #tpu.dot_dimension_numbers<[1], [0], [0], [1], [0, 0, 1, 1], [], []>} : vector<2x32xf32>, vector<32x128xf32>, vector<2x128xf32> -> vector<2x128xf32>
    %287 = arith.addf %285, %286 : vector<2x128xf32>
    %288 = arith.negf %287 : vector<2x128xf32>
    %289 = math.exp %288 : vector<2x128xf32>
    %cst_57 = arith.constant 1.000000e+00 : f32
    %290 = vector.broadcast %cst_57 : f32 to vector<2x128xf32>
    %291 = arith.addf %290, %289 : vector<2x128xf32>
    %292 = arith.divf %290, %291 : vector<2x128xf32>
    %293 = math.tanh %287 : vector<2x128xf32>
    %294 = vector.extract_strided_slice %292 {offsets = [0, 0], sizes = [2, 32], strides = [1, 1]} : vector<2x128xf32> to vector<2x32xf32>
    %295 = vector.extract_strided_slice %292 {offsets = [0, 32], sizes = [2, 32], strides = [1, 1]} : vector<2x128xf32> to vector<2x32xf32>
    %296 = vector.extract_strided_slice %293 {offsets = [0, 64], sizes = [2, 32], strides = [1, 1]} : vector<2x128xf32> to vector<2x32xf32>
    %297 = vector.extract_strided_slice %292 {offsets = [0, 96], sizes = [2, 32], strides = [1, 1]} : vector<2x128xf32> to vector<2x32xf32>
    %298 = arith.mulf %295, %282 : vector<2x32xf32>
    %299 = arith.mulf %294, %296 : vector<2x32xf32>
    %300 = arith.addf %298, %299 : vector<2x32xf32>
    %301 = math.tanh %300 : vector<2x32xf32>
    %302 = arith.mulf %297, %301 : vector<2x32xf32>
    %303 = vector.extract_strided_slice %174 {offsets = [14, 0], sizes = [2, 128], strides = [1, 1]} : vector<16x128xf32> to vector<2x128xf32>
    %cst_58 = arith.constant dense<0.000000e+00> : vector<2x128xf32>
    %304 = tpu.matmul %302, %169, %cst_58 {dimension_numbers = #tpu.dot_dimension_numbers<[1], [0], [0], [1], [0, 0, 1, 1], [], []>} : vector<2x32xf32>, vector<32x128xf32>, vector<2x128xf32> -> vector<2x128xf32>
    %305 = arith.addf %303, %304 : vector<2x128xf32>
    %306 = arith.negf %305 : vector<2x128xf32>
    %307 = math.exp %306 : vector<2x128xf32>
    %cst_59 = arith.constant 1.000000e+00 : f32
    %308 = vector.broadcast %cst_59 : f32 to vector<2x128xf32>
    %309 = arith.addf %308, %307 : vector<2x128xf32>
    %310 = arith.divf %308, %309 : vector<2x128xf32>
    %311 = math.tanh %305 : vector<2x128xf32>
    %312 = vector.extract_strided_slice %310 {offsets = [0, 0], sizes = [2, 32], strides = [1, 1]} : vector<2x128xf32> to vector<2x32xf32>
    %313 = vector.extract_strided_slice %310 {offsets = [0, 32], sizes = [2, 32], strides = [1, 1]} : vector<2x128xf32> to vector<2x32xf32>
    %314 = vector.extract_strided_slice %311 {offsets = [0, 64], sizes = [2, 32], strides = [1, 1]} : vector<2x128xf32> to vector<2x32xf32>
    %315 = vector.extract_strided_slice %310 {offsets = [0, 96], sizes = [2, 32], strides = [1, 1]} : vector<2x128xf32> to vector<2x32xf32>
    %316 = arith.mulf %313, %300 : vector<2x32xf32>
    %317 = arith.mulf %312, %314 : vector<2x32xf32>
    %318 = arith.addf %316, %317 : vector<2x32xf32>
    %319 = math.tanh %318 : vector<2x32xf32>
    %320 = arith.mulf %315, %319 : vector<2x32xf32>
    %c0_60 = arith.constant 0 : index
    %c0_61 = arith.constant 0 : index
    %321 = vector.load %arg6[%c0_60, %c0_61] : memref<1x32xf32, #tpu.memory_space<vmem>>, vector<1x32xf32>
    %322 = vector.broadcast %321 : vector<1x32xf32> to vector<2x32xf32>
    %323 = arith.mulf %194, %322 : vector<2x32xf32>
    %cst_62 = arith.constant dense<0.000000e+00> : vector<2xf32>
    %324 = vector.multi_reduction <add>, %323, %cst_62 [1] : vector<2x32xf32> to vector<2xf32>
    %325 = vector.shape_cast %324 : vector<2xf32> to vector<2x1xf32>
    %326 = vector.broadcast %321 : vector<1x32xf32> to vector<2x32xf32>
    %327 = arith.mulf %212, %326 : vector<2x32xf32>
    %cst_63 = arith.constant dense<0.000000e+00> : vector<2xf32>
    %328 = vector.multi_reduction <add>, %327, %cst_63 [1] : vector<2x32xf32> to vector<2xf32>
    %329 = vector.shape_cast %328 : vector<2xf32> to vector<2x1xf32>
    %330 = vector.broadcast %321 : vector<1x32xf32> to vector<2x32xf32>
    %331 = arith.mulf %230, %330 : vector<2x32xf32>
    %cst_64 = arith.constant dense<0.000000e+00> : vector<2xf32>
    %332 = vector.multi_reduction <add>, %331, %cst_64 [1] : vector<2x32xf32> to vector<2xf32>
    %333 = vector.shape_cast %332 : vector<2xf32> to vector<2x1xf32>
    %334 = vector.broadcast %321 : vector<1x32xf32> to vector<2x32xf32>
    %335 = arith.mulf %248, %334 : vector<2x32xf32>
    %cst_65 = arith.constant dense<0.000000e+00> : vector<2xf32>
    %336 = vector.multi_reduction <add>, %335, %cst_65 [1] : vector<2x32xf32> to vector<2xf32>
    %337 = vector.shape_cast %336 : vector<2xf32> to vector<2x1xf32>
    %338 = vector.broadcast %321 : vector<1x32xf32> to vector<2x32xf32>
    %339 = arith.mulf %266, %338 : vector<2x32xf32>
    %cst_66 = arith.constant dense<0.000000e+00> : vector<2xf32>
    %340 = vector.multi_reduction <add>, %339, %cst_66 [1] : vector<2x32xf32> to vector<2xf32>
    %341 = vector.shape_cast %340 : vector<2xf32> to vector<2x1xf32>
    %342 = vector.broadcast %321 : vector<1x32xf32> to vector<2x32xf32>
    %343 = arith.mulf %284, %342 : vector<2x32xf32>
    %cst_67 = arith.constant dense<0.000000e+00> : vector<2xf32>
    %344 = vector.multi_reduction <add>, %343, %cst_67 [1] : vector<2x32xf32> to vector<2xf32>
    %345 = vector.shape_cast %344 : vector<2xf32> to vector<2x1xf32>
    %346 = vector.broadcast %321 : vector<1x32xf32> to vector<2x32xf32>
    %347 = arith.mulf %302, %346 : vector<2x32xf32>
    %cst_68 = arith.constant dense<0.000000e+00> : vector<2xf32>
    %348 = vector.multi_reduction <add>, %347, %cst_68 [1] : vector<2x32xf32> to vector<2xf32>
    %349 = vector.shape_cast %348 : vector<2xf32> to vector<2x1xf32>
    %350 = vector.broadcast %321 : vector<1x32xf32> to vector<2x32xf32>
    %351 = arith.mulf %320, %350 : vector<2x32xf32>
    %cst_69 = arith.constant dense<0.000000e+00> : vector<2xf32>
    %352 = vector.multi_reduction <add>, %351, %cst_69 [1] : vector<2x32xf32> to vector<2xf32>
    %353 = vector.shape_cast %352 : vector<2xf32> to vector<2x1xf32>
    %354 = tpu.concatenate %325, %329, %333, %337, %341, %345, %349, %353 in 1 : vector<2x1xf32>, vector<2x1xf32>, vector<2x1xf32>, vector<2x1xf32>, vector<2x1xf32>, vector<2x1xf32>, vector<2x1xf32>, vector<2x1xf32> -> vector<2x8xf32>
    %c0_70 = arith.constant 0 : index
    %c0_71 = arith.constant 0 : index
    %355 = vector.load %arg7[%c0_70, %c0_71] : memref<1x1xf32, #tpu.memory_space<vmem>>, vector<1x1xf32>
    %356 = vector.broadcast %355 : vector<1x1xf32> to vector<2x8xf32>
    %357 = arith.addf %354, %356 : vector<2x8xf32>
    %c0_72 = arith.constant 0 : index
    %c0_73 = arith.constant 0 : index
    %358 = vector.load %arg8[%c0_72, %c0_73] : memref<8x4xf32, #tpu.memory_space<vmem>>, vector<8x4xf32>
    %cst_74 = arith.constant dense<0.000000e+00> : vector<2x4xf32>
    %359 = tpu.matmul %357, %358, %cst_74 {dimension_numbers = #tpu.dot_dimension_numbers<[1], [0], [0], [1], [0, 0, 1, 1], [], []>} : vector<2x8xf32>, vector<8x4xf32>, vector<2x4xf32> -> vector<2x4xf32>
    %c0_75 = arith.constant 0 : index
    %c0_76 = arith.constant 0 : index
    %360 = vector.load %arg9[%c0_75, %c0_76] : memref<1x4xf32, #tpu.memory_space<vmem>>, vector<1x4xf32>
    %361 = vector.broadcast %360 : vector<1x4xf32> to vector<2x4xf32>
    %362 = arith.addf %359, %361 : vector<2x4xf32>
    %c0_77 = arith.constant 0 : index
    %c0_78 = arith.constant 0 : index
    %363 = vector.load %arg10[%c0_77, %c0_78] : memref<2x4xf32, #tpu.memory_space<vmem>>, vector<2x4xf32>
    tpu.vector_store %arg10[%c0_77, %c0_78], %362 {strides = array<i32>} : memref<2x4xf32, #tpu.memory_space<vmem>>, vector<2x4xf32>,
    return
  }
}

</mosaic_0001>

<llo_original>
// kernel: contrast_rnn_forward.1
$region0: #{contrast_rnn_forward.1}
  #allocation0 [shape = 'u32[]', space=smem, size = 0x4, offset = 0x4, fixed_abs, tag = 'smem constant byte address 0x4 - core index']
  #allocation1 [shape = 'u32[144,128]{1,0:T(1,128)}', space=vmem, size = 0x12000, scoped, tag = 'internal scratch']
  #allocation2 [shape = 'f32[1,1]{1,0:T(1,128)S(1)}', space=vmem, size = 0x200, scoped, tag = 'scoped memory for contrast_rnn_forward.1']
  %s0 = inlined_call_operand.vmem [shape: f32[16,1], index: 0, kind: input, shape index: {}]
  %s1 = inlined_call_operand.vmem [shape: f32[1,32], index: 1, kind: input, shape index: {}]
  %s2 = inlined_call_operand.hbm [shape: f32[1,32], index: 2, kind: input, shape index: {}]
  %s3 = inlined_call_operand.vmem [shape: f32[2,32,128], index: 3, kind: input, shape index: {}]
  %s4 = inlined_call_operand.hbm [shape: f32[2,32,128], index: 4, kind: input, shape index: {}]
  %s5 = inlined_call_operand.vmem [shape: f32[2,1,128], index: 5, kind: input, shape index: {}]
  %s6 = inlined_call_operand.hbm [shape: f32[1,32], index: 6, kind: input, shape index: {}]
  %s7 = inlined_call_operand.<no memory space> [shape: f32[1,1], index: 7, kind: input, shape index: {}]
  %s8 = inlined_call_operand.vmem [shape: f32[8,4], index: 8, kind: input, shape index: {}]
  %s9 = inlined_call_operand.hbm [shape: f32[1,4], index: 9, kind: input, shape index: {}]
  %s10 = inlined_call_operand.hbm [shape: f32[2,4], index: 10, kind: output, shape index: {}]
  %s11 = sld [smem:[#allocation0]]
  $region66: #{contrast_rnn_forward.1} parent=0
    _
  %s13 = ssub.s32 1, %s11
  %s14 = scalar_select 0, %s13, %s11
  %v15 = vstv %s7
  %16 = vst [vmem:[#allocation2] sm:$0x1] %v15
  $region1: #{contrast_rnn_forward.1} parent=0
    #allocation3 [shape = 'u8[512]{0}', space=vmem, size = 0x400, scoped, tag = 'input window, operand 2, single buffered']
    #allocation4 [shape = 's32[1]{0}', space=sflag, size = 0x4, scoped, tag = 'scoped memory for contrast_rnn_forward.1']
    #allocation5 [shape = 's32[1]{0}', space=sflag, size = 0x4, scoped, tag = 'scoped memory for contrast_rnn_forward.1']
    #allocation6 [shape = 'u8[32768]{0}', space=vmem, size = 0x8000, scoped, tag = 'input window, operand 4, single buffered']
    #allocation7 [shape = 's32[1]{0}', space=sflag, size = 0x4, scoped, tag = 'scoped memory for contrast_rnn_forward.1']
    #allocation8 [shape = 'u8[512]{0}', space=vmem, size = 0x400, scoped, tag = 'input window, operand 6, single buffered']
    #allocation9 [shape = 'u8[512]{0}', space=vmem, size = 0x400, scoped, tag = 'input window, operand 9, single buffered']
    #allocation10 [shape = 's32[1]{0}', space=sflag, size = 0x4, scoped, tag = 'scoped memory for contrast_rnn_forward.1']
    #allocation11 [shape = 'u8[1024]{0}', space=vmem, size = 0x400, scoped, tag = 'output window, operand 0, single buffered']
    %17 = vsyncpa [#allocation4], 0
    %18 = vsyncpa [#allocation7], 0
    %19 = vsyncpa [#allocation10], 0
    %20 = vsyncpa [#allocation5], 0
    // Predicated region
    $region2: #{contrast_rnn_forward.1} parent=1 // pred_check
      _
    $region3: #{contrast_rnn_forward.1} parent=1 // pred_check_branch
      %22 = sbr.rel (0) target = $region5
    $region4: #{contrast_rnn_forward.1} parent=1 // pred_region
      _
    $region5: #{contrast_rnn_forward.1} parent=1 // pred_fallthru
      _
    // Predicated region
    $region6: #{contrast_rnn_forward.1} parent=1 // pred_check
      _
    $region7: #{contrast_rnn_forward.1} parent=1 // pred_check_branch
      %24 = sbr.rel (0) target = $region9
    $region8: #{contrast_rnn_forward.1} parent=1 // pred_region
      _
    $region9: #{contrast_rnn_forward.1} parent=1 // pred_fallthru
      _
    // Predicated region
    $region10: #{contrast_rnn_forward.1} parent=1 // pred_check
      _
    $region11: #{contrast_rnn_forward.1} parent=1 // pred_check_branch
      %26 = sbr.rel (0) target = $region13
    $region12: #{contrast_rnn_forward.1} parent=1 // pred_region
      %s28 = ssub.s32 16, 16
      %29 = vsyncadd [#allocation4], %s28
      %s31 = sshll.u32 [#allocation3], 4
      %s32 = int_to_ptr.vmem [resolvable:$true] %s31
      %34 = dma.hbm_to_vmem [thread:$0]  %s2, 16, %s32, [#allocation4]
    $region13: #{contrast_rnn_forward.1} parent=1 // pred_fallthru
      _
    // Predicated region
    $region14: #{contrast_rnn_forward.1} parent=1 // pred_check
      _
    $region15: #{contrast_rnn_forward.1} parent=1 // pred_check_branch
      %36 = sbr.rel (0) target = $region17
    $region16: #{contrast_rnn_forward.1} parent=1 // pred_region
      _
    $region17: #{contrast_rnn_forward.1} parent=1 // pred_fallthru
      _
    // Predicated region
    $region18: #{contrast_rnn_forward.1} parent=1 // pred_check
      _
    $region19: #{contrast_rnn_forward.1} parent=1 // pred_check_branch
      %38 = sbr.rel (0) target = $region21
    $region20: #{contrast_rnn_forward.1} parent=1 // pred_region
      %s40 = ssub.s32 1024, 1024
      %41 = vsyncadd [#allocation7], %s40
      %s42 = sshll.u32 [#allocation6], 4
      %s43 = int_to_ptr.vmem [resolvable:$true] %s42
      %48 = dma.hbm_to_vmem [thread:$0]  %s4, 1024, %s43, [#allocation7], 128, 128, 8
    $region21: #{contrast_rnn_forward.1} parent=1 // pred_fallthru
      _
    // Predicated region
    $region22: #{contrast_rnn_forward.1} parent=1 // pred_check
      _
    $region23: #{contrast_rnn_forward.1} parent=1 // pred_check_branch
      %50 = sbr.rel (0) target = $region25
    $region24: #{contrast_rnn_forward.1} parent=1 // pred_region
      _
    $region25: #{contrast_rnn_forward.1} parent=1 // pred_fallthru
      _
    // Predicated region
    $region26: #{contrast_rnn_forward.1} parent=1 // pred_check
      _
    $region27: #{contrast_rnn_forward.1} parent=1 // pred_check_branch
      %52 = sbr.rel (0) target = $region29
    $region28: #{contrast_rnn_forward.1} parent=1 // pred_region
      %s54 = ssub.s32 16, 16
      %55 = vsyncadd [#allocation7], %s54
      %s57 = sshll.u32 [#allocation8], 4
      %s58 = int_to_ptr.vmem [resolvable:$true] %s57
      %60 = dma.hbm_to_vmem [thread:$0]  %s6, 16, %s58, [#allocation7]
    $region29: #{contrast_rnn_forward.1} parent=1 // pred_fallthru
      _
    // Predicated region
    $region30: #{contrast_rnn_forward.1} parent=1 // pred_check
      _
    $region31: #{contrast_rnn_forward.1} parent=1 // pred_check_branch
      %62 = sbr.rel (0) target = $region33
    $region32: #{contrast_rnn_forward.1} parent=1 // pred_region
      _
    $region33: #{contrast_rnn_forward.1} parent=1 // pred_fallthru
      _
    // Predicated region
    $region34: #{contrast_rnn_forward.1} parent=1 // pred_check
      _
    $region35: #{contrast_rnn_forward.1} parent=1 // pred_check_branch
      %64 = sbr.rel (0) target = $region37
    $region36: #{contrast_rnn_forward.1} parent=1 // pred_region
      _
    $region37: #{contrast_rnn_forward.1} parent=1 // pred_fallthru
      _
    // Predicated region
    $region38: #{contrast_rnn_forward.1} parent=1 // pred_check
      _
    $region39: #{contrast_rnn_forward.1} parent=1 // pred_check_branch
      %66 = sbr.rel (0) target = $region41
    $region40: #{contrast_rnn_forward.1} parent=1 // pred_region
      %s68 = ssub.s32 16, 16
      %69 = vsyncadd [#allocation10], %s68
      %s71 = sshll.u32 [#allocation9], 4
      %s72 = int_to_ptr.vmem [resolvable:$true] %s71
      %74 = dma.hbm_to_vmem [thread:$0]  %s9, 16, %s72, [#allocation10]
    $region41: #{contrast_rnn_forward.1} parent=1 // pred_fallthru
      _
    // Predicated region
    $region42: #{contrast_rnn_forward.1} parent=1 // pred_check
      _
    $region43: #{contrast_rnn_forward.1} parent=1 // pred_check_branch
      %76 = sbr.rel (0) target = $region45
    $region44: #{contrast_rnn_forward.1} parent=1 // pred_region
      %77 = dma.done [#allocation4], 16
    $region45: #{contrast_rnn_forward.1} parent=1 // pred_fallthru
      _
    // Predicated region
    $region46: #{contrast_rnn_forward.1} parent=1 // pred_check
      _
    $region47: #{contrast_rnn_forward.1} parent=1 // pred_check_branch
      %79 = sbr.rel (0) target = $region49
    $region48: #{contrast_rnn_forward.1} parent=1 // pred_region
      %80 = dma.done [#allocation7], 1024
    $region49: #{contrast_rnn_forward.1} parent=1 // pred_fallthru
      _
    // Predicated region
    $region50: #{contrast_rnn_forward.1} parent=1 // pred_check
      _
    $region51: #{contrast_rnn_forward.1} parent=1 // pred_check_branch
      %82 = sbr.rel (0) target = $region53
    $region52: #{contrast_rnn_forward.1} parent=1 // pred_region
      %83 = dma.done [#allocation7], 16
    $region53: #{contrast_rnn_forward.1} parent=1 // pred_fallthru
      _
    // Predicated region
    $region54: #{contrast_rnn_forward.1} parent=1 // pred_check
      _
    $region55: #{contrast_rnn_forward.1} parent=1 // pred_check_branch
      %85 = sbr.rel (0) target = $region57
    $region56: #{contrast_rnn_forward.1} parent=1 // pred_region
      %86 = dma.done [#allocation10], 16
    $region57: #{contrast_rnn_forward.1} parent=1 // pred_fallthru
      _
    %v87 = vld [vmem:[%s0] sm:$0xff]
    %v88 = vld [vmem:[%s0 + $0x8] sm:$0xff]
    %v89 = vld [vmem:[%s1] sm:$0x1]
    %91 = vset.pattern.permute.xlu0 0
    %92 = vperm.xlu0 %91, %v87
    %v93 = vpop.permute.xlu0 %92
    %96 = vset.pattern.permute.xlu0 0
    %97 = vperm.xlu0 %96, %v88
    %v98 = vpop.permute.xlu0 %97
    %v101 = vlaneseq
    %v102 = vshrl.u32 %v101, 7
    %v103 = vsub.s32 0, %v102
    %v104 = vrot.slane %v89, %v103
    %v106 = vmul.f32 %v93, %v104
    %v107 = vmul.f32 %v98, %v104
    %v108 = vld [vmem:[#allocation3] sm:$0x1]
    %v110 = vlaneseq
    %v111 = vshrl.u32 %v110, 7
    %v112 = vsub.s32 0, %v111
    %v113 = vrot.slane %v108, %v112
    %v115 = vadd.f32 %v106, %v113
    %v116 = vadd.f32 %v107, %v113
    %v117 = vmax.f32 %v115, 0.0
    %v118 = vmax.f32 %v116, 0.0
    %v119 = vld [vmem:[%s3] sm:$0xff]
    %v120 = vld [vmem:[%s3 + $0x8] sm:$0xff]
    %v121 = vld [vmem:[%s3 + $0x10] sm:$0xff]
    %v122 = vld [vmem:[%s3 + $0x18] sm:$0xff]
    %v123 = vld [vmem:[#allocation6] sm:$0xff]
    %v124 = vld [vmem:[#allocation6 + $0x8] sm:$0xff]
    %v125 = vld [vmem:[#allocation6 + $0x10] sm:$0xff]
    %v126 = vld [vmem:[#allocation6 + $0x18] sm:$0xff]
    %v127 = vld [vmem:[%s5] sm:$0x1]
    %v129 = vlaneseq
    %v130 = vshrl.u32 %v129, 7
    %v131 = vsub.s32 0, %v130
    %v132 = vrot.slane %v127, %v131
    %vm134 = vcmask 261120
    %v136 = vsel %vm134, %v117, 0
    %v139 = vsel %vm134, %v118, 0
    %141 = vmatprep.subr.mxu0 0.0
    %142 = vmatpush1.msra.mxu0 0.0
    %143 = vmatprep.subr.mxu0 0.0
    %144 = vmatpush1.msra.mxu0 0.0
    %145 = vmatprep.subr.mxu0 0.0
    %146 = vmatpush1.msra.mxu0 0.0
    %147 = vmatprep.subr.mxu0 0.0
    %148 = vmatpush1.msra.mxu0 0.0
    %149 = vmatprep.subr.mxu0 0.0
    %150 = vmatpush1.msra.mxu0 0.0
    %151 = vmatprep.subr.mxu0 0.0
    %152 = vmatpush1.msra.mxu0 0.0
    %153 = vmatprep.subr.mxu0 0.0
    %154 = vmatpush1.msra.mxu0 0.0
    %155 = vmatprep.subr.mxu0 0.0
    %156 = vmatpush1.msra.mxu0 0.0
    %157 = vmatprep.subr.mxu0 0.0
    %158 = vmatpush1.msra.mxu0 0.0
    %159 = vmatprep.subr.mxu0 0.0
    %160 = vmatpush1.msra.mxu0 0.0
    %161 = vmatprep.subr.mxu0 0.0
    %162 = vmatpush1.msra.mxu0 0.0
    %163 = vmatprep.subr.mxu0 0.0
    %164 = vmatpush1.msra.mxu0 0.0
    %165 = vmatprep.subr.mxu0 0.0
    %166 = vmatpush1.msra.mxu0 %v122
    %167 = vmatprep.subr.mxu0 0.0
    %168 = vmatpush1.msra.mxu0 %v121
    %169 = vmatprep.subr.mxu0 0.0
    %170 = vmatpush1.msra.mxu0 %v120
    %171 = vmatprep.subr.mxu0 0.0
    %172 = vmatpush1.msra.mxu0 %v119
    %173 = vmatprep.subr.mxu0 0.0
    %174 = vmatpush2.msra.mxu0 0.0
    %175 = vmatprep.subr.mxu0 0.0
    %176 = vmatpush2.msra.mxu0 0.0
    %177 = vmatprep.subr.mxu0 0.0
    %178 = vmatpush2.msra.mxu0 0.0
    %179 = vmatprep.subr.mxu0 0.0
    %180 = vmatpush2.msra.mxu0 0.0
    %181 = vmatprep.subr.mxu0 0.0
    %182 = vmatpush2.msra.mxu0 0.0
    %183 = vmatprep.subr.mxu0 0.0
    %184 = vmatpush2.msra.mxu0 0.0
    %185 = vmatprep.subr.mxu0 0.0
    %186 = vmatpush2.msra.mxu0 0.0
    %187 = vmatprep.subr.mxu0 0.0
    %188 = vmatpush2.msra.mxu0 0.0
    %189 = vmatprep.subr.mxu0 0.0
    %190 = vmatpush2.msra.mxu0 0.0
    %191 = vmatprep.subr.mxu0 0.0
    %192 = vmatpush2.msra.mxu0 0.0
    %193 = vmatprep.subr.mxu0 0.0
    %194 = vmatpush2.msra.mxu0 0.0
    %195 = vmatprep.subr.mxu0 0.0
    %196 = vmatpush2.msra.mxu0 0.0
    %197 = vmatprep.subr.mxu0 0.0
    %198 = vmatpush2.msra.mxu0 0.0
    %199 = vmatprep.subr.mxu0 0.0
    %200 = vmatpush2.msra.mxu0 0.0
    %201 = vmatprep.subr.mxu0 0.0
    %202 = vmatpush2.msra.mxu0 0.0
    %203 = vmatprep.subr.mxu0 0.0
    %204 = vmatpush2.msra.mxu0 0.0
    %205 = vmatprep.mubr.f32.mxu0 0.0
    %206 = vmatmul.mubr.f32.gmra.mxu0 %v136
    %v207 = vpop.f32.mrf.mxu0
    %v208 = vadd.f32 %v132, %v207
    %v209 = vpop.f32.mrf.mxu0
    %210 = vmatprep.mubr.f32.mxu0 0.0
    %211 = vmatmul.mubr.f32.gmra.mxu0 %v139
    %v212 = vpop.f32.mrf.mxu0
    %v213 = vadd.f32 %v132, %v212
    %v214 = vpop.f32.mrf.mxu0
    %215 = vdwg.mxu0
    %v217 = vsel %vm134, 0.0, 0
    %219 = vmatprep.subr.mxu0 0.0
    %220 = vmatpush1.msra.mxu0 0.0
    %221 = vmatprep.subr.mxu0 0.0
    %222 = vmatpush1.msra.mxu0 0.0
    %223 = vmatprep.subr.mxu0 0.0
    %224 = vmatpush1.msra.mxu0 0.0
    %225 = vmatprep.subr.mxu0 0.0
    %226 = vmatpush1.msra.mxu0 0.0
    %227 = vmatprep.subr.mxu0 0.0
    %228 = vmatpush1.msra.mxu0 0.0
    %229 = vmatprep.subr.mxu0 0.0
    %230 = vmatpush1.msra.mxu0 0.0
    %231 = vmatprep.subr.mxu0 0.0
    %232 = vmatpush1.msra.mxu0 0.0
    %233 = vmatprep.subr.mxu0 0.0
    %234 = vmatpush1.msra.mxu0 0.0
    %235 = vmatprep.subr.mxu0 0.0
    %236 = vmatpush1.msra.mxu0 0.0
    %237 = vmatprep.subr.mxu0 0.0
    %238 = vmatpush1.msra.mxu0 0.0
    %239 = vmatprep.subr.mxu0 0.0
    %240 = vmatpush1.msra.mxu0 0.0
    %241 = vmatprep.subr.mxu0 0.0
    %242 = vmatpush1.msra.mxu0 0.0
    %243 = vmatprep.subr.mxu0 0.0
    %244 = vmatpush1.msra.mxu0 %v126
    %245 = vmatprep.subr.mxu0 0.0
    %246 = vmatpush1.msra.mxu0 %v125
    %247 = vmatprep.subr.mxu0 0.0
    %248 = vmatpush1.msra.mxu0 %v124
    %249 = vmatprep.subr.mxu0 0.0
    %250 = vmatpush1.msra.mxu0 %v123
    %251 = vmatprep.subr.mxu0 0.0
    %252 = vmatpush2.msra.mxu0 0.0
    %253 = vmatprep.subr.mxu0 0.0
    %254 = vmatpush2.msra.mxu0 0.0
    %255 = vmatprep.subr.mxu0 0.0
    %256 = vmatpush2.msra.mxu0 0.0
    %257 = vmatprep.subr.mxu0 0.0
    %258 = vmatpush2.msra.mxu0 0.0
    %259 = vmatprep.subr.mxu0 0.0
    %260 = vmatpush2.msra.mxu0 0.0
    %261 = vmatprep.subr.mxu0 0.0
    %262 = vmatpush2.msra.mxu0 0.0
    %263 = vmatprep.subr.mxu0 0.0
    %264 = vmatpush2.msra.mxu0 0.0
    %265 = vmatprep.subr.mxu0 0.0
    %266 = vmatpush2.msra.mxu0 0.0
    %267 = vmatprep.subr.mxu0 0.0
    %268 = vmatpush2.msra.mxu0 0.0
    %269 = vmatprep.subr.mxu0 0.0
    %270 = vmatpush2.msra.mxu0 0.0
    %271 = vmatprep.subr.mxu0 0.0
    %272 = vmatpush2.msra.mxu0 0.0
    %273 = vmatprep.subr.mxu0 0.0
    %274 = vmatpush2.msra.mxu0 0.0
    %275 = vmatprep.subr.mxu0 0.0
    %276 = vmatpush2.msra.mxu0 0.0
    %277 = vmatprep.subr.mxu0 0.0
    %278 = vmatpush2.msra.mxu0 0.0
    %279 = vmatprep.subr.mxu0 0.0
    %280 = vmatpush2.msra.mxu0 0.0
    %281 = vmatprep.subr.mxu0 0.0
    %282 = vmatpush2.msra.mxu0 0.0
    %283 = vmatprep.mubr.f32.mxu0 0.0
    %284 = vmatmul.mubr.f32.gmra.mxu0 %v217
    %v285 = vpop.f32.mrf.mxu0
    %v286 = vadd.f32 0.0, %v285
    %v287 = vpop.f32.mrf.mxu0
    %288 = vdwg.mxu0
    %v289 = vadd.f32 %v208, %v286
    %v290 = vxor.u32 %v289, 2147483648
    %v291 = vmul.f32 %v290, 1.442695
    %v292 = vpow.pop %v291
    %v293 = vadd.f32 %v292, 1.0
    %v294 = vrcp.pop %v293
    %v295 = vmul.f32 1.0, %v294
    %v296 = vtanh.pop %v289
    %v297 = vmul.f32 %v295, 0.0
    %299 = vrot.lane.b32.xlu0 %v296, 64
    %v300 = vpop.permute.xlu0 %299
    %v302 = vmul.f32 %v295, %v300
    %304 = vrot.lane.b32.xlu0 %v302, 32
    %v305 = vpop.permute.xlu0 %304
    %v307 = vadd.f32 %v297, %v305
    %v308 = vtanh.pop %v307
    %310 = vrot.lane.b32.xlu0 %v308, 64
    %v311 = vpop.permute.xlu0 %310
    %v313 = vmul.f32 %v295, %v311
    %315 = vrot.lane.b32.xlu0 %v313, 32
    %v316 = vpop.permute.xlu0 %315
    %v317 = vsel %vm134, %v316, 0
    %319 = vmatprep.subr.mxu0 0.0
    %320 = vmatpush1.msra.mxu0 0.0
    %321 = vmatprep.subr.mxu0 0.0
    %322 = vmatpush1.msra.mxu0 0.0
    %323 = vmatprep.subr.mxu0 0.0
    %324 = vmatpush1.msra.mxu0 0.0
    %325 = vmatprep.subr.mxu0 0.0
    %326 = vmatpush1.msra.mxu0 0.0
    %327 = vmatprep.subr.mxu0 0.0
    %328 = vmatpush1.msra.mxu0 0.0
    %329 = vmatprep.subr.mxu0 0.0
    %330 = vmatpush1.msra.mxu0 0.0
    %331 = vmatprep.subr.mxu0 0.0
    %332 = vmatpush1.msra.mxu0 0.0
    %333 = vmatprep.subr.mxu0 0.0
    %334 = vmatpush1.msra.mxu0 0.0
    %335 = vmatprep.subr.mxu0 0.0
    %336 = vmatpush1.msra.mxu0 0.0
    %337 = vmatprep.subr.mxu0 0.0
    %338 = vmatpush1.msra.mxu0 0.0
    %339 = vmatprep.subr.mxu0 0.0
    %340 = vmatpush1.msra.mxu0 0.0
    %341 = vmatprep.subr.mxu0 0.0
    %342 = vmatpush1.msra.mxu0 0.0
    %343 = vmatprep.subr.mxu0 0.0
    %344 = vmatpush1.msra.mxu0 %v126
    %345 = vmatprep.subr.mxu0 0.0
    %346 = vmatpush1.msra.mxu0 %v125
    %347 = vmatprep.subr.mxu0 0.0
    %348 = vmatpush1.msra.mxu0 %v124
    %349 = vmatprep.subr.mxu0 0.0
    %350 = vmatpush1.msra.mxu0 %v123
    %351 = vmatprep.subr.mxu0 0.0
    %352 = vmatpush2.msra.mxu0 0.0
    %353 = vmatprep.subr.mxu0 0.0
    %354 = vmatpush2.msra.mxu0 0.0
    %355 = vmatprep.subr.mxu0 0.0
    %356 = vmatpush2.msra.mxu0 0.0
    %357 = vmatprep.subr.mxu0 0.0
    %358 = vmatpush2.msra.mxu0 0.0
    %359 = vmatprep.subr.mxu0 0.0
    %360 = vmatpush2.msra.mxu0 0.0
    %361 = vmatprep.subr.mxu0 0.0
    %362 = vmatpush2.msra.mxu0 0.0
    %363 = vmatprep.subr.mxu0 0.0
    %364 = vmatpush2.msra.mxu0 0.0
    %365 = vmatprep.subr.mxu0 0.0
    %366 = vmatpush2.msra.mxu0 0.0
    %367 = vmatprep.subr.mxu0 0.0
    %368 = vmatpush2.msra.mxu0 0.0
    %369 = vmatprep.subr.mxu0 0.0
    %370 = vmatpush2.msra.mxu0 0.0
    %371 = vmatprep.subr.mxu0 0.0
    %372 = vmatpush2.msra.mxu0 0.0
    %373 = vmatprep.subr.mxu0 0.0
    %374 = vmatpush2.msra.mxu0 0.0
    %375 = vmatprep.subr.mxu0 0.0
    %376 = vmatpush2.msra.mxu0 0.0
    %377 = vmatprep.subr.mxu0 0.0
    %378 = vmatpush2.msra.mxu0 0.0
    %379 = vmatprep.subr.mxu0 0.0
    %380 = vmatpush2.msra.mxu0 0.0
    %381 = vmatprep.subr.mxu0 0.0
    %382 = vmatpush2.msra.mxu0 0.0
    %383 = vmatprep.mubr.f32.mxu0 0.0
    %384 = vmatmul.mubr.f32.gmra.mxu0 %v317
    %v385 = vpop.f32.mrf.mxu0
    %v386 = vadd.f32 0.0, %v385
    %v387 = vpop.f32.mrf.mxu0
    %388 = vdwg.mxu0
    %v390 = vrot.slane %v386, 6
    %v392 = vadd.f32 %v208, %v390
    %v393 = vxor.u32 %v392, 2147483648
    %v394 = vmul.f32 %v393, 1.442695
    %v395 = vpow.pop %v394
    %v396 = vadd.f32 %v395, 1.0
    %v397 = vrcp.pop %v396
    %v398 = vmul.f32 1.0, %v397
    %v399 = vtanh.pop %v392
    %v401 = vrot.slane %v307, 6
    %v403 = vmul.f32 %v398, %v401
    %405 = vrot.lane.b32.xlu0 %v399, 64
    %v406 = vpop.permute.xlu0 %405
    %v408 = vmul.f32 %v398, %v406
    %410 = vrot.lane.b32.xlu0 %v408, 32
    %v411 = vpop.permute.xlu0 %410
    %v413 = vadd.f32 %v403, %v411
    %v414 = vtanh.pop %v413
    %416 = vrot.lane.b32.xlu0 %v414, 64
    %v417 = vpop.permute.xlu0 %416
    %v419 = vmul.f32 %v398, %v417
    %v421 = vrot.slane %v419, 2
    %422 = vrot.lane.b32.xlu0 %v421, 32
    %v423 = vpop.permute.xlu0 %422
    %v424 = vsel %vm134, %v423, 0
    %426 = vmatprep.subr.mxu0 0.0
    %427 = vmatpush1.msra.mxu0 0.0
    %428 = vmatprep.subr.mxu0 0.0
    %429 = vmatpush1.msra.mxu0 0.0
    %430 = vmatprep.subr.mxu0 0.0
    %431 = vmatpush1.msra.mxu0 0.0
    %432 = vmatprep.subr.mxu0 0.0
    %433 = vmatpush1.msra.mxu0 0.0
    %434 = vmatprep.subr.mxu0 0.0
    %435 = vmatpush1.msra.mxu0 0.0
    %436 = vmatprep.subr.mxu0 0.0
    %437 = vmatpush1.msra.mxu0 0.0
    %438 = vmatprep.subr.mxu0 0.0
    %439 = vmatpush1.msra.mxu0 0.0
    %440 = vmatprep.subr.mxu0 0.0
    %441 = vmatpush1.msra.mxu0 0.0
    %442 = vmatprep.subr.mxu0 0.0
    %443 = vmatpush1.msra.mxu0 0.0
    %444 = vmatprep.subr.mxu0 0.0
    %445 = vmatpush1.msra.mxu0 0.0
    %446 = vmatprep.subr.mxu0 0.0
    %447 = vmatpush1.msra.mxu0 0.0
    %448 = vmatprep.subr.mxu0 0.0
    %449 = vmatpush1.msra.mxu0 0.0
    %450 = vmatprep.subr.mxu0 0.0
    %451 = vmatpush1.msra.mxu0 %v126
    %452 = vmatprep.subr.mxu0 0.0
    %453 = vmatpush1.msra.mxu0 %v125
    %454 = vmatprep.subr.mxu0 0.0
    %455 = vmatpush1.msra.mxu0 %v124
    %456 = vmatprep.subr.mxu0 0.0
    %457 = vmatpush1.msra.mxu0 %v123
    %458 = vmatprep.subr.mxu0 0.0
    %459 = vmatpush2.msra.mxu0 0.0
    %460 = vmatprep.subr.mxu0 0.0
    %461 = vmatpush2.msra.mxu0 0.0
    %462 = vmatprep.subr.mxu0 0.0
    %463 = vmatpush2.msra.mxu0 0.0
    %464 = vmatprep.subr.mxu0 0.0
    %465 = vmatpush2.msra.mxu0 0.0
    %466 = vmatprep.subr.mxu0 0.0
    %467 = vmatpush2.msra.mxu0 0.0
    %468 = vmatprep.subr.mxu0 0.0
    %469 = vmatpush2.msra.mxu0 0.0
    %470 = vmatprep.subr.mxu0 0.0
    %471 = vmatpush2.msra.mxu0 0.0
    %472 = vmatprep.subr.mxu0 0.0
    %473 = vmatpush2.msra.mxu0 0.0
    %474 = vmatprep.subr.mxu0 0.0
    %475 = vmatpush2.msra.mxu0 0.0
    %476 = vmatprep.subr.mxu0 0.0
    %477 = vmatpush2.msra.mxu0 0.0
    %478 = vmatprep.subr.mxu0 0.0
    %479 = vmatpush2.msra.mxu0 0.0
    %480 = vmatprep.subr.mxu0 0.0
    %481 = vmatpush2.msra.mxu0 0.0
    %482 = vmatprep.subr.mxu0 0.0
    %483 = vmatpush2.msra.mxu0 0.0
    %484 = vmatprep.subr.mxu0 0.0
    %485 = vmatpush2.msra.mxu0 0.0
    %486 = vmatprep.subr.mxu0 0.0
    %487 = vmatpush2.msra.mxu0 0.0
    %488 = vmatprep.subr.mxu0 0.0
    %489 = vmatpush2.msra.mxu0 0.0
    %490 = vmatprep.mubr.f32.mxu0 0.0
    %491 = vmatmul.mubr.f32.gmra.mxu0 %v424
    %v492 = vpop.f32.mrf.mxu0
    %v493 = vadd.f32 0.0, %v492
    %v494 = vpop.f32.mrf.mxu0
    %495 = vdwg.mxu0
    %v497 = vrot.slane %v493, 4
    %v499 = vadd.f32 %v208, %v497
    %v500 = vxor.u32 %v499, 2147483648
    %v501 = vmul.f32 %v500, 1.442695
    %v502 = vpow.pop %v501
    %v503 = vadd.f32 %v502, 1.0
    %v504 = vrcp.pop %v503
    %v505 = vmul.f32 1.0, %v504
    %v506 = vtanh.pop %v499
    %v508 = vrot.slane %v413, 6
    %v510 = vmul.f32 %v505, %v508
    %512 = vrot.lane.b32.xlu0 %v506, 64
    %v513 = vpop.permute.xlu0 %512
    %v515 = vmul.f32 %v505, %v513
    %517 = vrot.lane.b32.xlu0 %v515, 32
    %v518 = vpop.permute.xlu0 %517
    %v520 = vadd.f32 %v510, %v518
    %v521 = vtanh.pop %v520
    %523 = vrot.lane.b32.xlu0 %v521, 64
    %v524 = vpop.permute.xlu0 %523
    %v526 = vmul.f32 %v505, %v524
    %v528 = vrot.slane %v526, 4
    %529 = vrot.lane.b32.xlu0 %v528, 32
    %v530 = vpop.permute.xlu0 %529
    %v531 = vsel %vm134, %v530, 0
    %533 = vmatprep.subr.mxu0 0.0
    %534 = vmatpush1.msra.mxu0 0.0
    %535 = vmatprep.subr.mxu0 0.0
    %536 = vmatpush1.msra.mxu0 0.0
    %537 = vmatprep.subr.mxu0 0.0
    %538 = vmatpush1.msra.mxu0 0.0
    %539 = vmatprep.subr.mxu0 0.0
    %540 = vmatpush1.msra.mxu0 0.0
    %541 = vmatprep.subr.mxu0 0.0
    %542 = vmatpush1.msra.mxu0 0.0
    %543 = vmatprep.subr.mxu0 0.0
    %544 = vmatpush1.msra.mxu0 0.0
    %545 = vmatprep.subr.mxu0 0.0
    %546 = vmatpush1.msra.mxu0 0.0
    %547 = vmatprep.subr.mxu0 0.0
    %548 = vmatpush1.msra.mxu0 0.0
    %549 = vmatprep.subr.mxu0 0.0
    %550 = vmatpush1.msra.mxu0 0.0
    %551 = vmatprep.subr.mxu0 0.0
    %552 = vmatpush1.msra.mxu0 0.0
    %553 = vmatprep.subr.mxu0 0.0
    %554 = vmatpush1.msra.mxu0 0.0
    %555 = vmatprep.subr.mxu0 0.0
    %556 = vmatpush1.msra.mxu0 0.0
    %557 = vmatprep.subr.mxu0 0.0
    %558 = vmatpush1.msra.mxu0 %v126
    %559 = vmatprep.subr.mxu0 0.0
    %560 = vmatpush1.msra.mxu0 %v125
    %561 = vmatprep.subr.mxu0 0.0
    %562 = vmatpush1.msra.mxu0 %v124
    %563 = vmatprep.subr.mxu0 0.0
    %564 = vmatpush1.msra.mxu0 %v123
    %565 = vmatprep.subr.mxu0 0.0
    %566 = vmatpush2.msra.mxu0 0.0
    %567 = vmatprep.subr.mxu0 0.0
    %568 = vmatpush2.msra.mxu0 0.0
    %569 = vmatprep.subr.mxu0 0.0
    %570 = vmatpush2.msra.mxu0 0.0
    %571 = vmatprep.subr.mxu0 0.0
    %572 = vmatpush2.msra.mxu0 0.0
    %573 = vmatprep.subr.mxu0 0.0
    %574 = vmatpush2.msra.mxu0 0.0
    %575 = vmatprep.subr.mxu0 0.0
    %576 = vmatpush2.msra.mxu0 0.0
    %577 = vmatprep.subr.mxu0 0.0
    %578 = vmatpush2.msra.mxu0 0.0
    %579 = vmatprep.subr.mxu0 0.0
    %580 = vmatpush2.msra.mxu0 0.0
    %581 = vmatprep.subr.mxu0 0.0
    %582 = vmatpush2.msra.mxu0 0.0
    %583 = vmatprep.subr.mxu0 0.0
    %584 = vmatpush2.msra.mxu0 0.0
    %585 = vmatprep.subr.mxu0 0.0
    %586 = vmatpush2.msra.mxu0 0.0
    %587 = vmatprep.subr.mxu0 0.0
    %588 = vmatpush2.msra.mxu0 0.0
    %589 = vmatprep.subr.mxu0 0.0
    %590 = vmatpush2.msra.mxu0 0.0
    %591 = vmatprep.subr.mxu0 0.0
    %592 = vmatpush2.msra.mxu0 0.0
    %593 = vmatprep.subr.mxu0 0.0
    %594 = vmatpush2.msra.mxu0 0.0
    %595 = vmatprep.subr.mxu0 0.0
    %596 = vmatpush2.msra.mxu0 0.0
    %597 = vmatprep.mubr.f32.mxu0 0.0
    %598 = vmatmul.mubr.f32.gmra.mxu0 %v531
    %v599 = vpop.f32.mrf.mxu0
    %v600 = vadd.f32 0.0, %v599
    %v601 = vpop.f32.mrf.mxu0
    %602 = vdwg.mxu0
    %v604 = vrot.slane %v600, 2
    %v606 = vadd.f32 %v208, %v604
    %v607 = vxor.u32 %v606, 2147483648
    %v608 = vmul.f32 %v607, 1.442695
    %v609 = vpow.pop %v608
    %v610 = vadd.f32 %v609, 1.0
    %v611 = vrcp.pop %v610
    %v612 = vmul.f32 1.0, %v611
    %v613 = vtanh.pop %v606
    %v615 = vrot.slane %v520, 6
    %v617 = vmul.f32 %v612, %v615
    %619 = vrot.lane.b32.xlu0 %v613, 64
    %v620 = vpop.permute.xlu0 %619
    %v622 = vmul.f32 %v612, %v620
    %624 = vrot.lane.b32.xlu0 %v622, 32
    %v625 = vpop.permute.xlu0 %624
    %v627 = vadd.f32 %v617, %v625
    %v628 = vtanh.pop %v627
    %630 = vrot.lane.b32.xlu0 %v628, 64
    %v631 = vpop.permute.xlu0 %630
    %v633 = vmul.f32 %v612, %v631
    %v635 = vrot.slane %v633, 6
    %636 = vrot.lane.b32.xlu0 %v635, 32
    %v637 = vpop.permute.xlu0 %636
    %v638 = vsel %vm134, %v637, 0
    %640 = vmatprep.subr.mxu0 0.0
    %641 = vmatpush1.msra.mxu0 0.0
    %642 = vmatprep.subr.mxu0 0.0
    %643 = vmatpush1.msra.mxu0 0.0
    %644 = vmatprep.subr.mxu0 0.0
    %645 = vmatpush1.msra.mxu0 0.0
    %646 = vmatprep.subr.mxu0 0.0
    %647 = vmatpush1.msra.mxu0 0.0
    %648 = vmatprep.subr.mxu0 0.0
    %649 = vmatpush1.msra.mxu0 0.0
    %650 = vmatprep.subr.mxu0 0.0
    %651 = vmatpush1.msra.mxu0 0.0
    %652 = vmatprep.subr.mxu0 0.0
    %653 = vmatpush1.msra.mxu0 0.0
    %654 = vmatprep.subr.mxu0 0.0
    %655 = vmatpush1.msra.mxu0 0.0
    %656 = vmatprep.subr.mxu0 0.0
    %657 = vmatpush1.msra.mxu0 0.0
    %658 = vmatprep.subr.mxu0 0.0
    %659 = vmatpush1.msra.mxu0 0.0
    %660 = vmatprep.subr.mxu0 0.0
    %661 = vmatpush1.msra.mxu0 0.0
    %662 = vmatprep.subr.mxu0 0.0
    %663 = vmatpush1.msra.mxu0 0.0
    %664 = vmatprep.subr.mxu0 0.0
    %665 = vmatpush1.msra.mxu0 %v126
    %666 = vmatprep.subr.mxu0 0.0
    %667 = vmatpush1.msra.mxu0 %v125
    %668 = vmatprep.subr.mxu0 0.0
    %669 = vmatpush1.msra.mxu0 %v124
    %670 = vmatprep.subr.mxu0 0.0
    %671 = vmatpush1.msra.mxu0 %v123
    %672 = vmatprep.subr.mxu0 0.0
    %673 = vmatpush2.msra.mxu0 0.0
    %674 = vmatprep.subr.mxu0 0.0
    %675 = vmatpush2.msra.mxu0 0.0
    %676 = vmatprep.subr.mxu0 0.0
    %677 = vmatpush2.msra.mxu0 0.0
    %678 = vmatprep.subr.mxu0 0.0
    %679 = vmatpush2.msra.mxu0 0.0
    %680 = vmatprep.subr.mxu0 0.0
    %681 = vmatpush2.msra.mxu0 0.0
    %682 = vmatprep.subr.mxu0 0.0
    %683 = vmatpush2.msra.mxu0 0.0
    %684 = vmatprep.subr.mxu0 0.0
    %685 = vmatpush2.msra.mxu0 0.0
    %686 = vmatprep.subr.mxu0 0.0
    %687 = vmatpush2.msra.mxu0 0.0
    %688 = vmatprep.subr.mxu0 0.0
    %689 = vmatpush2.msra.mxu0 0.0
    %690 = vmatprep.subr.mxu0 0.0
    %691 = vmatpush2.msra.mxu0 0.0
    %692 = vmatprep.subr.mxu0 0.0
    %693 = vmatpush2.msra.mxu0 0.0
    %694 = vmatprep.subr.mxu0 0.0
    %695 = vmatpush2.msra.mxu0 0.0
    %696 = vmatprep.subr.mxu0 0.0
    %697 = vmatpush2.msra.mxu0 0.0
    %698 = vmatprep.subr.mxu0 0.0
    %699 = vmatpush2.msra.mxu0 0.0
    %700 = vmatprep.subr.mxu0 0.0
    %701 = vmatpush2.msra.mxu0 0.0
    %702 = vmatprep.subr.mxu0 0.0
    %703 = vmatpush2.msra.mxu0 0.0
    %704 = vmatprep.mubr.f32.mxu0 0.0
    %705 = vmatmul.mubr.f32.gmra.mxu0 %v638
    %v706 = vpop.f32.mrf.mxu0
    %v707 = vadd.f32 0.0, %v706
    %v708 = vpop.f32.mrf.mxu0
    %709 = vdwg.mxu0
    %v710 = vadd.f32 %v213, %v707
    %v711 = vxor.u32 %v710, 2147483648
    %v712 = vmul.f32 %v711, 1.442695
    %v713 = vpow.pop %v712
    %v714 = vadd.f32 %v713, 1.0
    %v715 = vrcp.pop %v714
    %v716 = vmul.f32 1.0, %v715
    %v717 = vtanh.pop %v710
    %v719 = vrot.slane %v627, 6
    %v721 = vmul.f32 %v716, %v719
    %723 = vrot.lane.b32.xlu0 %v717, 64
    %v724 = vpop.permute.xlu0 %723
    %v726 = vmul.f32 %v716, %v724
    %728 = vrot.lane.b32.xlu0 %v726, 32
    %v729 = vpop.permute.xlu0 %728
    %v731 = vadd.f32 %v721, %v729
    %v732 = vtanh.pop %v731
    %734 = vrot.lane.b32.xlu0 %v732, 64
    %v735 = vpop.permute.xlu0 %734
    %v737 = vmul.f32 %v716, %v735
    %739 = vrot.lane.b32.xlu0 %v737, 32
    %v740 = vpop.permute.xlu0 %739
    %v741 = vsel %vm134, %v740, 0
    %743 = vmatprep.subr.mxu0 0.0
    %744 = vmatpush1.msra.mxu0 0.0
    %745 = vmatprep.subr.mxu0 0.0
    %746 = vmatpush1.msra.mxu0 0.0
    %747 = vmatprep.subr.mxu0 0.0
    %748 = vmatpush1.msra.mxu0 0.0
    %749 = vmatprep.subr.mxu0 0.0
    %750 = vmatpush1.msra.mxu0 0.0
    %751 = vmatprep.subr.mxu0 0.0
    %752 = vmatpush1.msra.mxu0 0.0
    %753 = vmatprep.subr.mxu0 0.0
    %754 = vmatpush1.msra.mxu0 0.0
    %755 = vmatprep.subr.mxu0 0.0
    %756 = vmatpush1.msra.mxu0 0.0
    %757 = vmatprep.subr.mxu0 0.0
    %758 = vmatpush1.msra.mxu0 0.0
    %759 = vmatprep.subr.mxu0 0.0
    %760 = vmatpush1.msra.mxu0 0.0
    %761 = vmatprep.subr.mxu0 0.0
    %762 = vmatpush1.msra.mxu0 0.0
    %763 = vmatprep.subr.mxu0 0.0
    %764 = vmatpush1.msra.mxu0 0.0
    %765 = vmatprep.subr.mxu0 0.0
    %766 = vmatpush1.msra.mxu0 0.0
    %767 = vmatprep.subr.mxu0 0.0
    %768 = vmatpush1.msra.mxu0 %v126
    %769 = vmatprep.subr.mxu0 0.0
    %770 = vmatpush1.msra.mxu0 %v125
    %771 = vmatprep.subr.mxu0 0.0
    %772 = vmatpush1.msra.mxu0 %v124
    %773 = vmatprep.subr.mxu0 0.0
    %774 = vmatpush1.msra.mxu0 %v123
    %775 = vmatprep.subr.mxu0 0.0
    %776 = vmatpush2.msra.mxu0 0.0
    %777 = vmatprep.subr.mxu0 0.0
    %778 = vmatpush2.msra.mxu0 0.0
    %779 = vmatprep.subr.mxu0 0.0
    %780 = vmatpush2.msra.mxu0 0.0
    %781 = vmatprep.subr.mxu0 0.0
    %782 = vmatpush2.msra.mxu0 0.0
    %783 = vmatprep.subr.mxu0 0.0
    %784 = vmatpush2.msra.mxu0 0.0
    %785 = vmatprep.subr.mxu0 0.0
    %786 = vmatpush2.msra.mxu0 0.0
    %787 = vmatprep.subr.mxu0 0.0
    %788 = vmatpush2.msra.mxu0 0.0
    %789 = vmatprep.subr.mxu0 0.0
    %790 = vmatpush2.msra.mxu0 0.0
    %791 = vmatprep.subr.mxu0 0.0
    %792 = vmatpush2.msra.mxu0 0.0
    %793 = vmatprep.subr.mxu0 0.0
    %794 = vmatpush2.msra.mxu0 0.0
    %795 = vmatprep.subr.mxu0 0.0
    %796 = vmatpush2.msra.mxu0 0.0
    %797 = vmatprep.subr.mxu0 0.0
    %798 = vmatpush2.msra.mxu0 0.0
    %799 = vmatprep.subr.mxu0 0.0
    %800 = vmatpush2.msra.mxu0 0.0
    %801 = vmatprep.subr.mxu0 0.0
    %802 = vmatpush2.msra.mxu0 0.0
    %803 = vmatprep.subr.mxu0 0.0
    %804 = vmatpush2.msra.mxu0 0.0
    %805 = vmatprep.subr.mxu0 0.0
    %806 = vmatpush2.msra.mxu0 0.0
    %807 = vmatprep.mubr.f32.mxu0 0.0
    %808 = vmatmul.mubr.f32.gmra.mxu0 %v741
    %v809 = vpop.f32.mrf.mxu0
    %v810 = vadd.f32 0.0, %v809
    %v811 = vpop.f32.mrf.mxu0
    %812 = vdwg.mxu0
    %v814 = vrot.slane %v810, 6
    %v816 = vadd.f32 %v213, %v814
    %v817 = vxor.u32 %v816, 2147483648
    %v818 = vmul.f32 %v817, 1.442695
    %v819 = vpow.pop %v818
    %v820 = vadd.f32 %v819, 1.0
    %v821 = vrcp.pop %v820
    %v822 = vmul.f32 1.0, %v821
    %v823 = vtanh.pop %v816
    %v825 = vrot.slane %v731, 6
    %v827 = vmul.f32 %v822, %v825
    %829 = vrot.lane.b32.xlu0 %v823, 64
    %v830 = vpop.permute.xlu0 %829
    %v832 = vmul.f32 %v822, %v830
    %834 = vrot.lane.b32.xlu0 %v832, 32
    %v835 = vpop.permute.xlu0 %834
    %v837 = vadd.f32 %v827, %v835
    %v838 = vtanh.pop %v837
    %840 = vrot.lane.b32.xlu0 %v838, 64
    %v841 = vpop.permute.xlu0 %840
    %v843 = vmul.f32 %v822, %v841
    %v845 = vrot.slane %v843, 2
    %846 = vrot.lane.b32.xlu0 %v845, 32
    %v847 = vpop.permute.xlu0 %846
    %v848 = vsel %vm134, %v847, 0
    %850 = vmatprep.subr.mxu0 0.0
    %851 = vmatpush1.msra.mxu0 0.0
    %852 = vmatprep.subr.mxu0 0.0
    %853 = vmatpush1.msra.mxu0 0.0
    %854 = vmatprep.subr.mxu0 0.0
    %855 = vmatpush1.msra.mxu0 0.0
    %856 = vmatprep.subr.mxu0 0.0
    %857 = vmatpush1.msra.mxu0 0.0
    %858 = vmatprep.subr.mxu0 0.0
    %859 = vmatpush1.msra.mxu0 0.0
    %860 = vmatprep.subr.mxu0 0.0
    %861 = vmatpush1.msra.mxu0 0.0
    %862 = vmatprep.subr.mxu0 0.0
    %863 = vmatpush1.msra.mxu0 0.0
    %864 = vmatprep.subr.mxu0 0.0
    %865 = vmatpush1.msra.mxu0 0.0
    %866 = vmatprep.subr.mxu0 0.0
    %867 = vmatpush1.msra.mxu0 0.0
    %868 = vmatprep.subr.mxu0 0.0
    %869 = vmatpush1.msra.mxu0 0.0
    %870 = vmatprep.subr.mxu0 0.0
    %871 = vmatpush1.msra.mxu0 0.0
    %872 = vmatprep.subr.mxu0 0.0
    %873 = vmatpush1.msra.mxu0 0.0
    %874 = vmatprep.subr.mxu0 0.0
    %875 = vmatpush1.msra.mxu0 %v126
    %876 = vmatprep.subr.mxu0 0.0
    %877 = vmatpush1.msra.mxu0 %v125
    %878 = vmatprep.subr.mxu0 0.0
    %879 = vmatpush1.msra.mxu0 %v124
    %880 = vmatprep.subr.mxu0 0.0
    %881 = vmatpush1.msra.mxu0 %v123
    %882 = vmatprep.subr.mxu0 0.0
    %883 = vmatpush2.msra.mxu0 0.0
    %884 = vmatprep.subr.mxu0 0.0
    %885 = vmatpush2.msra.mxu0 0.0
    %886 = vmatprep.subr.mxu0 0.0
    %887 = vmatpush2.msra.mxu0 0.0
    %888 = vmatprep.subr.mxu0 0.0
    %889 = vmatpush2.msra.mxu0 0.0
    %890 = vmatprep.subr.mxu0 0.0
    %891 = vmatpush2.msra.mxu0 0.0
    %892 = vmatprep.subr.mxu0 0.0
    %893 = vmatpush2.msra.mxu0 0.0
    %894 = vmatprep.subr.mxu0 0.0
    %895 = vmatpush2.msra.mxu0 0.0
    %896 = vmatprep.subr.mxu0 0.0
    %897 = vmatpush2.msra.mxu0 0.0
    %898 = vmatprep.subr.mxu0 0.0
    %899 = vmatpush2.msra.mxu0 0.0
    %900 = vmatprep.subr.mxu0 0.0
    %901 = vmatpush2.msra.mxu0 0.0
    %902 = vmatprep.subr.mxu0 0.0
    %903 = vmatpush2.msra.mxu0 0.0
    %904 = vmatprep.subr.mxu0 0.0
    %905 = vmatpush2.msra.mxu0 0.0
    %906 = vmatprep.subr.mxu0 0.0
    %907 = vmatpush2.msra.mxu0 0.0
    %908 = vmatprep.subr.mxu0 0.0
    %909 = vmatpush2.msra.mxu0 0.0
    %910 = vmatprep.subr.mxu0 0.0
    %911 = vmatpush2.msra.mxu0 0.0
    %912 = vmatprep.subr.mxu0 0.0
    %913 = vmatpush2.msra.mxu0 0.0
    %914 = vmatprep.mubr.f32.mxu0 0.0
    %915 = vmatmul.mubr.f32.gmra.mxu0 %v848
    %v916 = vpop.f32.mrf.mxu0
    %v917 = vadd.f32 0.0, %v916
    %v918 = vpop.f32.mrf.mxu0
    %919 = vdwg.mxu0
    %v921 = vrot.slane %v917, 4
    %v923 = vadd.f32 %v213, %v921
    %v924 = vxor.u32 %v923, 2147483648
    %v925 = vmul.f32 %v924, 1.442695
    %v926 = vpow.pop %v925
    %v927 = vadd.f32 %v926, 1.0
    %v928 = vrcp.pop %v927
    %v929 = vmul.f32 1.0, %v928
    %v930 = vtanh.pop %v923
    %v932 = vrot.slane %v837, 6
    %v934 = vmul.f32 %v929, %v932
    %936 = vrot.lane.b32.xlu0 %v930, 64
    %v937 = vpop.permute.xlu0 %936
    %v939 = vmul.f32 %v929, %v937
    %941 = vrot.lane.b32.xlu0 %v939, 32
    %v942 = vpop.permute.xlu0 %941
    %v944 = vadd.f32 %v934, %v942
    %v945 = vtanh.pop %v944
    %947 = vrot.lane.b32.xlu0 %v945, 64
    %v948 = vpop.permute.xlu0 %947
    %v950 = vmul.f32 %v929, %v948
    %v952 = vrot.slane %v950, 4
    %953 = vrot.lane.b32.xlu0 %v952, 32
    %v954 = vpop.permute.xlu0 %953
    %v955 = vsel %vm134, %v954, 0
    %957 = vmatprep.subr.mxu0 0.0
    %958 = vmatpush1.msra.mxu0 0.0
    %959 = vmatprep.subr.mxu0 0.0
    %960 = vmatpush1.msra.mxu0 0.0
    %961 = vmatprep.subr.mxu0 0.0
    %962 = vmatpush1.msra.mxu0 0.0
    %963 = vmatprep.subr.mxu0 0.0
    %964 = vmatpush1.msra.mxu0 0.0
    %965 = vmatprep.subr.mxu0 0.0
    %966 = vmatpush1.msra.mxu0 0.0
    %967 = vmatprep.subr.mxu0 0.0
    %968 = vmatpush1.msra.mxu0 0.0
    %969 = vmatprep.subr.mxu0 0.0
    %970 = vmatpush1.msra.mxu0 0.0
    %971 = vmatprep.subr.mxu0 0.0
    %972 = vmatpush1.msra.mxu0 0.0
    %973 = vmatprep.subr.mxu0 0.0
    %974 = vmatpush1.msra.mxu0 0.0
    %975 = vmatprep.subr.mxu0 0.0
    %976 = vmatpush1.msra.mxu0 0.0
    %977 = vmatprep.subr.mxu0 0.0
    %978 = vmatpush1.msra.mxu0 0.0
    %979 = vmatprep.subr.mxu0 0.0
    %980 = vmatpush1.msra.mxu0 0.0
    %981 = vmatprep.subr.mxu0 0.0
    %982 = vmatpush1.msra.mxu0 %v126
    %983 = vmatprep.subr.mxu0 0.0
    %984 = vmatpush1.msra.mxu0 %v125
    %985 = vmatprep.subr.mxu0 0.0
    %986 = vmatpush1.msra.mxu0 %v124
    %987 = vmatprep.subr.mxu0 0.0
    %988 = vmatpush1.msra.mxu0 %v123
    %989 = vmatprep.subr.mxu0 0.0
    %990 = vmatpush2.msra.mxu0 0.0
    %991 = vmatprep.subr.mxu0 0.0
    %992 = vmatpush2.msra.mxu0 0.0
    %993 = vmatprep.subr.mxu0 0.0
    %994 = vmatpush2.msra.mxu0 0.0
    %995 = vmatprep.subr.mxu0 0.0
    %996 = vmatpush2.msra.mxu0 0.0
    %997 = vmatprep.subr.mxu0 0.0
    %998 = vmatpush2.msra.mxu0 0.0
    %999 = vmatprep.subr.mxu0 0.0
    %1000 = vmatpush2.msra.mxu0 0.0
    %1001 = vmatprep.subr.mxu0 0.0
    %1002 = vmatpush2.msra.mxu0 0.0
    %1003 = vmatprep.subr.mxu0 0.0
    %1004 = vmatpush2.msra.mxu0 0.0
    %1005 = vmatprep.subr.mxu0 0.0
    %1006 = vmatpush2.msra.mxu0 0.0
    %1007 = vmatprep.subr.mxu0 0.0
    %1008 = vmatpush2.msra.mxu0 0.0
    %1009 = vmatprep.subr.mxu0 0.0
    %1010 = vmatpush2.msra.mxu0 0.0
    %1011 = vmatprep.subr.mxu0 0.0
    %1012 = vmatpush2.msra.mxu0 0.0
    %1013 = vmatprep.subr.mxu0 0.0
    %1014 = vmatpush2.msra.mxu0 0.0
    %1015 = vmatprep.subr.mxu0 0.0
    %1016 = vmatpush2.msra.mxu0 0.0
    %1017 = vmatprep.subr.mxu0 0.0
    %1018 = vmatpush2.msra.mxu0 0.0
    %1019 = vmatprep.subr.mxu0 0.0
    %1020 = vmatpush2.msra.mxu0 0.0
    %1021 = vmatprep.mubr.f32.mxu0 0.0
    %1022 = vmatmul.mubr.f32.gmra.mxu0 %v955
    %v1023 = vpop.f32.mrf.mxu0
    %v1024 = vadd.f32 0.0, %v1023
    %v1025 = vpop.f32.mrf.mxu0
    %1026 = vdwg.mxu0
    %v1028 = vrot.slane %v1024, 2
    %v1030 = vadd.f32 %v213, %v1028
    %v1031 = vxor.u32 %v1030, 2147483648
    %v1032 = vmul.f32 %v1031, 1.442695
    %v1033 = vpow.pop %v1032
    %v1034 = vadd.f32 %v1033, 1.0
    %v1035 = vrcp.pop %v1034
    %v1036 = vmul.f32 1.0, %v1035
    %v1037 = vtanh.pop %v1030
    %v1039 = vrot.slane %v944, 6
    %v1041 = vmul.f32 %v1036, %v1039
    %1043 = vrot.lane.b32.xlu0 %v1037, 64
    %v1044 = vpop.permute.xlu0 %1043
    %v1046 = vmul.f32 %v1036, %v1044
    %1048 = vrot.lane.b32.xlu0 %v1046, 32
    %v1049 = vpop.permute.xlu0 %1048
    %v1051 = vadd.f32 %v1041, %v1049
    %v1052 = vtanh.pop %v1051
    %1054 = vrot.lane.b32.xlu0 %v1052, 64
    %v1055 = vpop.permute.xlu0 %1054
    %v1057 = vmul.f32 %v1036, %v1055
    %vm1058 = vcmask 1041408
    %v1059 = vsel %vm1058, %v313, %v419
    %vm1060 = vcmask 1043456
    %v1061 = vsel %vm1060, %v1059, %v526
    %vm1062 = vcmask 1045504
    %v1063 = vsel %vm1062, %v1061, %v633
    %v1064 = vsel %vm1058, %v737, %v843
    %v1065 = vsel %vm1060, %v1064, %v950
    %v1066 = vsel %vm1062, %v1065, %v1057
    %s1067 = scalar_lea.vmem %s3, 32
    %v1068 = vld [vmem:[%s1067] sm:$0xff]
    %v1069 = vld [vmem:[%s1067 + $0x8] sm:$0xff]
    %v1070 = vld [vmem:[%s1067 + $0x10] sm:$0xff]
    %v1071 = vld [vmem:[%s1067 + $0x18] sm:$0xff]
    %s1072 = scalar_lea.vmem [#allocation6], 32
    %v1073 = vld [vmem:[%s1072] sm:$0xff]
    %v1074 = vld [vmem:[%s1072 + $0x8] sm:$0xff]
    %v1075 = vld [vmem:[%s1072 + $0x10] sm:$0xff]
    %v1076 = vld [vmem:[%s1072 + $0x18] sm:$0xff]
    %s1077 = scalar_lea.vmem %s5, 1
    %v1078 = vld [vmem:[%s1077] sm:$0x1]
    %v1080 = vlaneseq
    %v1081 = vshrl.u32 %v1080, 7
    %v1082 = vsub.s32 0, %v1081
    %v1083 = vrot.slane %v1078, %v1082
    %1087 = vrot.lane.b32.xlu0 %v1063, 32
    %v1088 = vpop.permute.xlu0 %1087
    %1089 = vrot.lane.b32.xlu0 %v1066, 32
    %v1090 = vpop.permute.xlu0 %1089
    %v1091 = vsel %vm134, %v1088, 0
    %v1093 = vsel %vm134, %v1090, 0
    %1095 = vmatprep.subr.mxu0 0.0
    %1096 = vmatpush1.msra.mxu0 0.0
    %1097 = vmatprep.subr.mxu0 0.0
    %1098 = vmatpush1.msra.mxu0 0.0
    %1099 = vmatprep.subr.mxu0 0.0
    %1100 = vmatpush1.msra.mxu0 0.0
    %1101 = vmatprep.subr.mxu0 0.0
    %1102 = vmatpush1.msra.mxu0 0.0
    %1103 = vmatprep.subr.mxu0 0.0
    %1104 = vmatpush1.msra.mxu0 0.0
    %1105 = vmatprep.subr.mxu0 0.0
    %1106 = vmatpush1.msra.mxu0 0.0
    %1107 = vmatprep.subr.mxu0 0.0
    %1108 = vmatpush1.msra.mxu0 0.0
    %1109 = vmatprep.subr.mxu0 0.0
    %1110 = vmatpush1.msra.mxu0 0.0
    %1111 = vmatprep.subr.mxu0 0.0
    %1112 = vmatpush1.msra.mxu0 0.0
    %1113 = vmatprep.subr.mxu0 0.0
    %1114 = vmatpush1.msra.mxu0 0.0
    %1115 = vmatprep.subr.mxu0 0.0
    %1116 = vmatpush1.msra.mxu0 0.0
    %1117 = vmatprep.subr.mxu0 0.0
    %1118 = vmatpush1.msra.mxu0 0.0
    %1119 = vmatprep.subr.mxu0 0.0
    %1120 = vmatpush1.msra.mxu0 %v1071
    %1121 = vmatprep.subr.mxu0 0.0
    %1122 = vmatpush1.msra.mxu0 %v1070
    %1123 = vmatprep.subr.mxu0 0.0
    %1124 = vmatpush1.msra.mxu0 %v1069
    %1125 = vmatprep.subr.mxu0 0.0
    %1126 = vmatpush1.msra.mxu0 %v1068
    %1127 = vmatprep.subr.mxu0 0.0
    %1128 = vmatpush2.msra.mxu0 0.0
    %1129 = vmatprep.subr.mxu0 0.0
    %1130 = vmatpush2.msra.mxu0 0.0
    %1131 = vmatprep.subr.mxu0 0.0
    %1132 = vmatpush2.msra.mxu0 0.0
    %1133 = vmatprep.subr.mxu0 0.0
    %1134 = vmatpush2.msra.mxu0 0.0
    %1135 = vmatprep.subr.mxu0 0.0
    %1136 = vmatpush2.msra.mxu0 0.0
    %1137 = vmatprep.subr.mxu0 0.0
    %1138 = vmatpush2.msra.mxu0 0.0
    %1139 = vmatprep.subr.mxu0 0.0
    %1140 = vmatpush2.msra.mxu0 0.0
    %1141 = vmatprep.subr.mxu0 0.0
    %1142 = vmatpush2.msra.mxu0 0.0
    %1143 = vmatprep.subr.mxu0 0.0
    %1144 = vmatpush2.msra.mxu0 0.0
    %1145 = vmatprep.subr.mxu0 0.0
    %1146 = vmatpush2.msra.mxu0 0.0
    %1147 = vmatprep.subr.mxu0 0.0
    %1148 = vmatpush2.msra.mxu0 0.0
    %1149 = vmatprep.subr.mxu0 0.0
    %1150 = vmatpush2.msra.mxu0 0.0
    %1151 = vmatprep.subr.mxu0 0.0
    %1152 = vmatpush2.msra.mxu0 0.0
    %1153 = vmatprep.subr.mxu0 0.0
    %1154 = vmatpush2.msra.mxu0 0.0
    %1155 = vmatprep.subr.mxu0 0.0
    %1156 = vmatpush2.msra.mxu0 0.0
    %1157 = vmatprep.subr.mxu0 0.0
    %1158 = vmatpush2.msra.mxu0 0.0
    %1159 = vmatprep.mubr.f32.mxu0 0.0
    %1160 = vmatmul.mubr.f32.gmra.mxu0 %v1091
    %v1161 = vpop.f32.mrf.mxu0
    %v1162 = vadd.f32 %v1083, %v1161
    %v1163 = vpop.f32.mrf.mxu0
    %1164 = vmatprep.mubr.f32.mxu0 0.0
    %1165 = vmatmul.mubr.f32.gmra.mxu0 %v1093
    %v1166 = vpop.f32.mrf.mxu0
    %v1167 = vadd.f32 %v1083, %v1166
    %v1168 = vpop.f32.mrf.mxu0
    %1169 = vdwg.mxu0
    %1170 = vmatprep.subr.mxu0 0.0
    %1171 = vmatpush1.msra.mxu0 0.0
    %1172 = vmatprep.subr.mxu0 0.0
    %1173 = vmatpush1.msra.mxu0 0.0
    %1174 = vmatprep.subr.mxu0 0.0
    %1175 = vmatpush1.msra.mxu0 0.0
    %1176 = vmatprep.subr.mxu0 0.0
    %1177 = vmatpush1.msra.mxu0 0.0
    %1178 = vmatprep.subr.mxu0 0.0
    %1179 = vmatpush1.msra.mxu0 0.0
    %1180 = vmatprep.subr.mxu0 0.0
    %1181 = vmatpush1.msra.mxu0 0.0
    %1182 = vmatprep.subr.mxu0 0.0
    %1183 = vmatpush1.msra.mxu0 0.0
    %1184 = vmatprep.subr.mxu0 0.0
    %1185 = vmatpush1.msra.mxu0 0.0
    %1186 = vmatprep.subr.mxu0 0.0
    %1187 = vmatpush1.msra.mxu0 0.0
    %1188 = vmatprep.subr.mxu0 0.0
    %1189 = vmatpush1.msra.mxu0 0.0
    %1190 = vmatprep.subr.mxu0 0.0
    %1191 = vmatpush1.msra.mxu0 0.0
    %1192 = vmatprep.subr.mxu0 0.0
    %1193 = vmatpush1.msra.mxu0 0.0
    %1194 = vmatprep.subr.mxu0 0.0
    %1195 = vmatpush1.msra.mxu0 %v1076
    %1196 = vmatprep.subr.mxu0 0.0
    %1197 = vmatpush1.msra.mxu0 %v1075
    %1198 = vmatprep.subr.mxu0 0.0
    %1199 = vmatpush1.msra.mxu0 %v1074
    %1200 = vmatprep.subr.mxu0 0.0
    %1201 = vmatpush1.msra.mxu0 %v1073
    %1202 = vmatprep.subr.mxu0 0.0
    %1203 = vmatpush2.msra.mxu0 0.0
    %1204 = vmatprep.subr.mxu0 0.0
    %1205 = vmatpush2.msra.mxu0 0.0
    %1206 = vmatprep.subr.mxu0 0.0
    %1207 = vmatpush2.msra.mxu0 0.0
    %1208 = vmatprep.subr.mxu0 0.0
    %1209 = vmatpush2.msra.mxu0 0.0
    %1210 = vmatprep.subr.mxu0 0.0
    %1211 = vmatpush2.msra.mxu0 0.0
    %1212 = vmatprep.subr.mxu0 0.0
    %1213 = vmatpush2.msra.mxu0 0.0
    %1214 = vmatprep.subr.mxu0 0.0
    %1215 = vmatpush2.msra.mxu0 0.0
    %1216 = vmatprep.subr.mxu0 0.0
    %1217 = vmatpush2.msra.mxu0 0.0
    %1218 = vmatprep.subr.mxu0 0.0
    %1219 = vmatpush2.msra.mxu0 0.0
    %1220 = vmatprep.subr.mxu0 0.0
    %1221 = vmatpush2.msra.mxu0 0.0
    %1222 = vmatprep.subr.mxu0 0.0
    %1223 = vmatpush2.msra.mxu0 0.0
    %1224 = vmatprep.subr.mxu0 0.0
    %1225 = vmatpush2.msra.mxu0 0.0
    %1226 = vmatprep.subr.mxu0 0.0
    %1227 = vmatpush2.msra.mxu0 0.0
    %1228 = vmatprep.subr.mxu0 0.0
    %1229 = vmatpush2.msra.mxu0 0.0
    %1230 = vmatprep.subr.mxu0 0.0
    %1231 = vmatpush2.msra.mxu0 0.0
    %1232 = vmatprep.subr.mxu0 0.0
    %1233 = vmatpush2.msra.mxu0 0.0
    %1234 = vmatprep.mubr.f32.mxu0 0.0
    %1235 = vmatmul.mubr.f32.gmra.mxu0 %v217
    %v1236 = vpop.f32.mrf.mxu0
    %v1237 = vadd.f32 0.0, %v1236
    %v1238 = vpop.f32.mrf.mxu0
    %1239 = vdwg.mxu0
    %v1240 = vadd.f32 %v1162, %v1237
    %v1241 = vxor.u32 %v1240, 2147483648
    %v1242 = vmul.f32 %v1241, 1.442695
    %v1243 = vpow.pop %v1242
    %v1244 = vadd.f32 %v1243, 1.0
    %v1245 = vrcp.pop %v1244
    %v1246 = vmul.f32 1.0, %v1245
    %v1247 = vtanh.pop %v1240
    %v1248 = vmul.f32 %v1246, 0.0
    %1250 = vrot.lane.b32.xlu0 %v1247, 64
    %v1251 = vpop.permute.xlu0 %1250
    %v1253 = vmul.f32 %v1246, %v1251
    %1255 = vrot.lane.b32.xlu0 %v1253, 32
    %v1256 = vpop.permute.xlu0 %1255
    %v1258 = vadd.f32 %v1248, %v1256
    %v1259 = vtanh.pop %v1258
    %1261 = vrot.lane.b32.xlu0 %v1259, 64
    %v1262 = vpop.permute.xlu0 %1261
    %v1264 = vmul.f32 %v1246, %v1262
    %1266 = vrot.lane.b32.xlu0 %v1264, 32
    %v1267 = vpop.permute.xlu0 %1266
    %v1268 = vsel %vm134, %v1267, 0
    %1270 = vmatprep.subr.mxu0 0.0
    %1271 = vmatpush1.msra.mxu0 0.0
    %1272 = vmatprep.subr.mxu0 0.0
    %1273 = vmatpush1.msra.mxu0 0.0
    %1274 = vmatprep.subr.mxu0 0.0
    %1275 = vmatpush1.msra.mxu0 0.0
    %1276 = vmatprep.subr.mxu0 0.0
    %1277 = vmatpush1.msra.mxu0 0.0
    %1278 = vmatprep.subr.mxu0 0.0
    %1279 = vmatpush1.msra.mxu0 0.0
    %1280 = vmatprep.subr.mxu0 0.0
    %1281 = vmatpush1.msra.mxu0 0.0
    %1282 = vmatprep.subr.mxu0 0.0
    %1283 = vmatpush1.msra.mxu0 0.0
    %1284 = vmatprep.subr.mxu0 0.0
    %1285 = vmatpush1.msra.mxu0 0.0
    %1286 = vmatprep.subr.mxu0 0.0
    %1287 = vmatpush1.msra.mxu0 0.0
    %1288 = vmatprep.subr.mxu0 0.0
    %1289 = vmatpush1.msra.mxu0 0.0
    %1290 = vmatprep.subr.mxu0 0.0
    %1291 = vmatpush1.msra.mxu0 0.0
    %1292 = vmatprep.subr.mxu0 0.0
    %1293 = vmatpush1.msra.mxu0 0.0
    %1294 = vmatprep.subr.mxu0 0.0
    %1295 = vmatpush1.msra.mxu0 %v1076
    %1296 = vmatprep.subr.mxu0 0.0
    %1297 = vmatpush1.msra.mxu0 %v1075
    %1298 = vmatprep.subr.mxu0 0.0
    %1299 = vmatpush1.msra.mxu0 %v1074
    %1300 = vmatprep.subr.mxu0 0.0
    %1301 = vmatpush1.msra.mxu0 %v1073
    %1302 = vmatprep.subr.mxu0 0.0
    %1303 = vmatpush2.msra.mxu0 0.0
    %1304 = vmatprep.subr.mxu0 0.0
    %1305 = vmatpush2.msra.mxu0 0.0
    %1306 = vmatprep.subr.mxu0 0.0
    %1307 = vmatpush2.msra.mxu0 0.0
    %1308 = vmatprep.subr.mxu0 0.0
    %1309 = vmatpush2.msra.mxu0 0.0
    %1310 = vmatprep.subr.mxu0 0.0
    %1311 = vmatpush2.msra.mxu0 0.0
    %1312 = vmatprep.subr.mxu0 0.0
    %1313 = vmatpush2.msra.mxu0 0.0
    %1314 = vmatprep.subr.mxu0 0.0
    %1315 = vmatpush2.msra.mxu0 0.0
    %1316 = vmatprep.subr.mxu0 0.0
    %1317 = vmatpush2.msra.mxu0 0.0
    %1318 = vmatprep.subr.mxu0 0.0
    %1319 = vmatpush2.msra.mxu0 0.0
    %1320 = vmatprep.subr.mxu0 0.0
    %1321 = vmatpush2.msra.mxu0 0.0
    %1322 = vmatprep.subr.mxu0 0.0
    %1323 = vmatpush2.msra.mxu0 0.0
    %1324 = vmatprep.subr.mxu0 0.0
    %1325 = vmatpush2.msra.mxu0 0.0
    %1326 = vmatprep.subr.mxu0 0.0
    %1327 = vmatpush2.msra.mxu0 0.0
    %1328 = vmatprep.subr.mxu0 0.0
    %1329 = vmatpush2.msra.mxu0 0.0
    %1330 = vmatprep.subr.mxu0 0.0
    %1331 = vmatpush2.msra.mxu0 0.0
    %1332 = vmatprep.subr.mxu0 0.0
    %1333 = vmatpush2.msra.mxu0 0.0
    %1334 = vmatprep.mubr.f32.mxu0 0.0
    %1335 = vmatmul.mubr.f32.gmra.mxu0 %v1268
    %v1336 = vpop.f32.mrf.mxu0
    %v1337 = vadd.f32 0.0, %v1336
    %v1338 = vpop.f32.mrf.mxu0
    %1339 = vdwg.mxu0
    %v1341 = vrot.slane %v1337, 6
    %v1343 = vadd.f32 %v1162, %v1341
    %v1344 = vxor.u32 %v1343, 2147483648
    %v1345 = vmul.f32 %v1344, 1.442695
    %v1346 = vpow.pop %v1345
    %v1347 = vadd.f32 %v1346, 1.0
    %v1348 = vrcp.pop %v1347
    %v1349 = vmul.f32 1.0, %v1348
    %v1350 = vtanh.pop %v1343
    %v1352 = vrot.slane %v1258, 6
    %v1354 = vmul.f32 %v1349, %v1352
    %1356 = vrot.lane.b32.xlu0 %v1350, 64
    %v1357 = vpop.permute.xlu0 %1356
    %v1359 = vmul.f32 %v1349, %v1357
    %1361 = vrot.lane.b32.xlu0 %v1359, 32
    %v1362 = vpop.permute.xlu0 %1361
    %v1364 = vadd.f32 %v1354, %v1362
    %v1365 = vtanh.pop %v1364
    %1367 = vrot.lane.b32.xlu0 %v1365, 64
    %v1368 = vpop.permute.xlu0 %1367
    %v1370 = vmul.f32 %v1349, %v1368
    %v1372 = vrot.slane %v1370, 2
    %1373 = vrot.lane.b32.xlu0 %v1372, 32
    %v1374 = vpop.permute.xlu0 %1373
    %v1375 = vsel %vm134, %v1374, 0
    %1377 = vmatprep.subr.mxu0 0.0
    %1378 = vmatpush1.msra.mxu0 0.0
    %1379 = vmatprep.subr.mxu0 0.0
    %1380 = vmatpush1.msra.mxu0 0.0
    %1381 = vmatprep.subr.mxu0 0.0
    %1382 = vmatpush1.msra.mxu0 0.0
    %1383 = vmatprep.subr.mxu0 0.0
    %1384 = vmatpush1.msra.mxu0 0.0
    %1385 = vmatprep.subr.mxu0 0.0
    %1386 = vmatpush1.msra.mxu0 0.0
    %1387 = vmatprep.subr.mxu0 0.0
    %1388 = vmatpush1.msra.mxu0 0.0
    %1389 = vmatprep.subr.mxu0 0.0
    %1390 = vmatpush1.msra.mxu0 0.0
    %1391 = vmatprep.subr.mxu0 0.0
    %1392 = vmatpush1.msra.mxu0 0.0
    %1393 = vmatprep.subr.mxu0 0.0
    %1394 = vmatpush1.msra.mxu0 0.0
    %1395 = vmatprep.subr.mxu0 0.0
    %1396 = vmatpush1.msra.mxu0 0.0
    %1397 = vmatprep.subr.mxu0 0.0
    %1398 = vmatpush1.msra.mxu0 0.0
    %1399 = vmatprep.subr.mxu0 0.0
    %1400 = vmatpush1.msra.mxu0 0.0
    %1401 = vmatprep.subr.mxu0 0.0
    %1402 = vmatpush1.msra.mxu0 %v1076
    %1403 = vmatprep.subr.mxu0 0.0
    %1404 = vmatpush1.msra.mxu0 %v1075
    %1405 = vmatprep.subr.mxu0 0.0
    %1406 = vmatpush1.msra.mxu0 %v1074
    %1407 = vmatprep.subr.mxu0 0.0
    %1408 = vmatpush1.msra.mxu0 %v1073
    %1409 = vmatprep.subr.mxu0 0.0
    %1410 = vmatpush2.msra.mxu0 0.0
    %1411 = vmatprep.subr.mxu0 0.0
    %1412 = vmatpush2.msra.mxu0 0.0
    %1413 = vmatprep.subr.mxu0 0.0
    %1414 = vmatpush2.msra.mxu0 0.0
    %1415 = vmatprep.subr.mxu0 0.0
    %1416 = vmatpush2.msra.mxu0 0.0
    %1417 = vmatprep.subr.mxu0 0.0
    %1418 = vmatpush2.msra.mxu0 0.0
    %1419 = vmatprep.subr.mxu0 0.0
    %1420 = vmatpush2.msra.mxu0 0.0
    %1421 = vmatprep.subr.mxu0 0.0
    %1422 = vmatpush2.msra.mxu0 0.0
    %1423 = vmatprep.subr.mxu0 0.0
    %1424 = vmatpush2.msra.mxu0 0.0
    %1425 = vmatprep.subr.mxu0 0.0
    %1426 = vmatpush2.msra.mxu0 0.0
    %1427 = vmatprep.subr.mxu0 0.0
    %1428 = vmatpush2.msra.mxu0 0.0
    %1429 = vmatprep.subr.mxu0 0.0
    %1430 = vmatpush2.msra.mxu0 0.0
    %1431 = vmatprep.subr.mxu0 0.0
    %1432 = vmatpush2.msra.mxu0 0.0
    %1433 = vmatprep.subr.mxu0 0.0
    %1434 = vmatpush2.msra.mxu0 0.0
    %1435 = vmatprep.subr.mxu0 0.0
    %1436 = vmatpush2.msra.mxu0 0.0
    %1437 = vmatprep.subr.mxu0 0.0
    %1438 = vmatpush2.msra.mxu0 0.0
    %1439 = vmatprep.subr.mxu0 0.0
    %1440 = vmatpush2.msra.mxu0 0.0
    %1441 = vmatprep.mubr.f32.mxu0 0.0
    %1442 = vmatmul.mubr.f32.gmra.mxu0 %v1375
    %v1443 = vpop.f32.mrf.mxu0
    %v1444 = vadd.f32 0.0, %v1443
    %v1445 = vpop.f32.mrf.mxu0
    %1446 = vdwg.mxu0
    %v1448 = vrot.slane %v1444, 4
    %v1450 = vadd.f32 %v1162, %v1448
    %v1451 = vxor.u32 %v1450, 2147483648
    %v1452 = vmul.f32 %v1451, 1.442695
    %v1453 = vpow.pop %v1452
    %v1454 = vadd.f32 %v1453, 1.0
    %v1455 = vrcp.pop %v1454
    %v1456 = vmul.f32 1.0, %v1455
    %v1457 = vtanh.pop %v1450
    %v1459 = vrot.slane %v1364, 6
    %v1461 = vmul.f32 %v1456, %v1459
    %1463 = vrot.lane.b32.xlu0 %v1457, 64
    %v1464 = vpop.permute.xlu0 %1463
    %v1466 = vmul.f32 %v1456, %v1464
    %1468 = vrot.lane.b32.xlu0 %v1466, 32
    %v1469 = vpop.permute.xlu0 %1468
    %v1471 = vadd.f32 %v1461, %v1469
    %v1472 = vtanh.pop %v1471
    %1474 = vrot.lane.b32.xlu0 %v1472, 64
    %v1475 = vpop.permute.xlu0 %1474
    %v1477 = vmul.f32 %v1456, %v1475
    %v1479 = vrot.slane %v1477, 4
    %1480 = vrot.lane.b32.xlu0 %v1479, 32
    %v1481 = vpop.permute.xlu0 %1480
    %v1482 = vsel %vm134, %v1481, 0
    %1484 = vmatprep.subr.mxu0 0.0
    %1485 = vmatpush1.msra.mxu0 0.0
    %1486 = vmatprep.subr.mxu0 0.0
    %1487 = vmatpush1.msra.mxu0 0.0
    %1488 = vmatprep.subr.mxu0 0.0
    %1489 = vmatpush1.msra.mxu0 0.0
    %1490 = vmatprep.subr.mxu0 0.0
    %1491 = vmatpush1.msra.mxu0 0.0
    %1492 = vmatprep.subr.mxu0 0.0
    %1493 = vmatpush1.msra.mxu0 0.0
    %1494 = vmatprep.subr.mxu0 0.0
    %1495 = vmatpush1.msra.mxu0 0.0
    %1496 = vmatprep.subr.mxu0 0.0
    %1497 = vmatpush1.msra.mxu0 0.0
    %1498 = vmatprep.subr.mxu0 0.0
    %1499 = vmatpush1.msra.mxu0 0.0
    %1500 = vmatprep.subr.mxu0 0.0
    %1501 = vmatpush1.msra.mxu0 0.0
    %1502 = vmatprep.subr.mxu0 0.0
    %1503 = vmatpush1.msra.mxu0 0.0
    %1504 = vmatprep.subr.mxu0 0.0
    %1505 = vmatpush1.msra.mxu0 0.0
    %1506 = vmatprep.subr.mxu0 0.0
    %1507 = vmatpush1.msra.mxu0 0.0
    %1508 = vmatprep.subr.mxu0 0.0
    %1509 = vmatpush1.msra.mxu0 %v1076
    %1510 = vmatprep.subr.mxu0 0.0
    %1511 = vmatpush1.msra.mxu0 %v1075
    %1512 = vmatprep.subr.mxu0 0.0
    %1513 = vmatpush1.msra.mxu0 %v1074
    %1514 = vmatprep.subr.mxu0 0.0
    %1515 = vmatpush1.msra.mxu0 %v1073
    %1516 = vmatprep.subr.mxu0 0.0
    %1517 = vmatpush2.msra.mxu0 0.0
    %1518 = vmatprep.subr.mxu0 0.0
    %1519 = vmatpush2.msra.mxu0 0.0
    %1520 = vmatprep.subr.mxu0 0.0
    %1521 = vmatpush2.msra.mxu0 0.0
    %1522 = vmatprep.subr.mxu0 0.0
    %1523 = vmatpush2.msra.mxu0 0.0
    %1524 = vmatprep.subr.mxu0 0.0
    %1525 = vmatpush2.msra.mxu0 0.0
    %1526 = vmatprep.subr.mxu0 0.0
    %1527 = vmatpush2.msra.mxu0 0.0
    %1528 = vmatprep.subr.mxu0 0.0
    %1529 = vmatpush2.msra.mxu0 0.0
    %1530 = vmatprep.subr.mxu0 0.0
    %1531 = vmatpush2.msra.mxu0 0.0
    %1532 = vmatprep.subr.mxu0 0.0
    %1533 = vmatpush2.msra.mxu0 0.0
    %1534 = vmatprep.subr.mxu0 0.0
    %1535 = vmatpush2.msra.mxu0 0.0
    %1536 = vmatprep.subr.mxu0 0.0
    %1537 = vmatpush2.msra.mxu0 0.0
    %1538 = vmatprep.subr.mxu0 0.0
    %1539 = vmatpush2.msra.mxu0 0.0
    %1540 = vmatprep.subr.mxu0 0.0
    %1541 = vmatpush2.msra.mxu0 0.0
    %1542 = vmatprep.subr.mxu0 0.0
    %1543 = vmatpush2.msra.mxu0 0.0
    %1544 = vmatprep.subr.mxu0 0.0
    %1545 = vmatpush2.msra.mxu0 0.0
    %1546 = vmatprep.subr.mxu0 0.0
    %1547 = vmatpush2.msra.mxu0 0.0
    %1548 = vmatprep.mubr.f32.mxu0 0.0
    %1549 = vmatmul.mubr.f32.gmra.mxu0 %v1482
    %v1550 = vpop.f32.mrf.mxu0
    %v1551 = vadd.f32 0.0, %v1550
    %v1552 = vpop.f32.mrf.mxu0
    %1553 = vdwg.mxu0
    %v1555 = vrot.slane %v1551, 2
    %v1557 = vadd.f32 %v1162, %v1555
    %v1558 = vxor.u32 %v1557, 2147483648
    %v1559 = vmul.f32 %v1558, 1.442695
    %v1560 = vpow.pop %v1559
    %v1561 = vadd.f32 %v1560, 1.0
    %v1562 = vrcp.pop %v1561
    %v1563 = vmul.f32 1.0, %v1562
    %v1564 = vtanh.pop %v1557
    %v1566 = vrot.slane %v1471, 6
    %v1568 = vmul.f32 %v1563, %v1566
    %1570 = vrot.lane.b32.xlu0 %v1564, 64
    %v1571 = vpop.permute.xlu0 %1570
    %v1573 = vmul.f32 %v1563, %v1571
    %1575 = vrot.lane.b32.xlu0 %v1573, 32
    %v1576 = vpop.permute.xlu0 %1575
    %v1578 = vadd.f32 %v1568, %v1576
    %v1579 = vtanh.pop %v1578
    %1581 = vrot.lane.b32.xlu0 %v1579, 64
    %v1582 = vpop.permute.xlu0 %1581
    %v1584 = vmul.f32 %v1563, %v1582
    %v1586 = vrot.slane %v1584, 6
    %1587 = vrot.lane.b32.xlu0 %v1586, 32
    %v1588 = vpop.permute.xlu0 %1587
    %v1589 = vsel %vm134, %v1588, 0
    %1591 = vmatprep.subr.mxu0 0.0
    %1592 = vmatpush1.msra.mxu0 0.0
    %1593 = vmatprep.subr.mxu0 0.0
    %1594 = vmatpush1.msra.mxu0 0.0
    %1595 = vmatprep.subr.mxu0 0.0
    %1596 = vmatpush1.msra.mxu0 0.0
    %1597 = vmatprep.subr.mxu0 0.0
    %1598 = vmatpush1.msra.mxu0 0.0
    %1599 = vmatprep.subr.mxu0 0.0
    %1600 = vmatpush1.msra.mxu0 0.0
    %1601 = vmatprep.subr.mxu0 0.0
    %1602 = vmatpush1.msra.mxu0 0.0
    %1603 = vmatprep.subr.mxu0 0.0
    %1604 = vmatpush1.msra.mxu0 0.0
    %1605 = vmatprep.subr.mxu0 0.0
    %1606 = vmatpush1.msra.mxu0 0.0
    %1607 = vmatprep.subr.mxu0 0.0
    %1608 = vmatpush1.msra.mxu0 0.0
    %1609 = vmatprep.subr.mxu0 0.0
    %1610 = vmatpush1.msra.mxu0 0.0
    %1611 = vmatprep.subr.mxu0 0.0
    %1612 = vmatpush1.msra.mxu0 0.0
    %1613 = vmatprep.subr.mxu0 0.0
    %1614 = vmatpush1.msra.mxu0 0.0
    %1615 = vmatprep.subr.mxu0 0.0
    %1616 = vmatpush1.msra.mxu0 %v1076
    %1617 = vmatprep.subr.mxu0 0.0
    %1618 = vmatpush1.msra.mxu0 %v1075
    %1619 = vmatprep.subr.mxu0 0.0
    %1620 = vmatpush1.msra.mxu0 %v1074
    %1621 = vmatprep.subr.mxu0 0.0
    %1622 = vmatpush1.msra.mxu0 %v1073
    %1623 = vmatprep.subr.mxu0 0.0
    %1624 = vmatpush2.msra.mxu0 0.0
    %1625 = vmatprep.subr.mxu0 0.0
    %1626 = vmatpush2.msra.mxu0 0.0
    %1627 = vmatprep.subr.mxu0 0.0
    %1628 = vmatpush2.msra.mxu0 0.0
    %1629 = vmatprep.subr.mxu0 0.0
    %1630 = vmatpush2.msra.mxu0 0.0
    %1631 = vmatprep.subr.mxu0 0.0
    %1632 = vmatpush2.msra.mxu0 0.0
    %1633 = vmatprep.subr.mxu0 0.0
    %1634 = vmatpush2.msra.mxu0 0.0
    %1635 = vmatprep.subr.mxu0 0.0
    %1636 = vmatpush2.msra.mxu0 0.0
    %1637 = vmatprep.subr.mxu0 0.0
    %1638 = vmatpush2.msra.mxu0 0.0
    %1639 = vmatprep.subr.mxu0 0.0
    %1640 = vmatpush2.msra.mxu0 0.0
    %1641 = vmatprep.subr.mxu0 0.0
    %1642 = vmatpush2.msra.mxu0 0.0
    %1643 = vmatprep.subr.mxu0 0.0
    %1644 = vmatpush2.msra.mxu0 0.0
    %1645 = vmatprep.subr.mxu0 0.0
    %1646 = vmatpush2.msra.mxu0 0.0
    %1647 = vmatprep.subr.mxu0 0.0
    %1648 = vmatpush2.msra.mxu0 0.0
    %1649 = vmatprep.subr.mxu0 0.0
    %1650 = vmatpush2.msra.mxu0 0.0
    %1651 = vmatprep.subr.mxu0 0.0
    %1652 = vmatpush2.msra.mxu0 0.0
    %1653 = vmatprep.subr.mxu0 0.0
    %1654 = vmatpush2.msra.mxu0 0.0
    %1655 = vmatprep.mubr.f32.mxu0 0.0
    %1656 = vmatmul.mubr.f32.gmra.mxu0 %v1589
    %v1657 = vpop.f32.mrf.mxu0
    %v1658 = vadd.f32 0.0, %v1657
    %v1659 = vpop.f32.mrf.mxu0
    %1660 = vdwg.mxu0
    %v1661 = vadd.f32 %v1167, %v1658
    %v1662 = vxor.u32 %v1661, 2147483648
    %v1663 = vmul.f32 %v1662, 1.442695
    %v1664 = vpow.pop %v1663
    %v1665 = vadd.f32 %v1664, 1.0
    %v1666 = vrcp.pop %v1665
    %v1667 = vmul.f32 1.0, %v1666
    %v1668 = vtanh.pop %v1661
    %v1670 = vrot.slane %v1578, 6
    %v1672 = vmul.f32 %v1667, %v1670
    %1674 = vrot.lane.b32.xlu0 %v1668, 64
    %v1675 = vpop.permute.xlu0 %1674
    %v1677 = vmul.f32 %v1667, %v1675
    %1679 = vrot.lane.b32.xlu0 %v1677, 32
    %v1680 = vpop.permute.xlu0 %1679
    %v1682 = vadd.f32 %v1672, %v1680
    %v1683 = vtanh.pop %v1682
    %1685 = vrot.lane.b32.xlu0 %v1683, 64
    %v1686 = vpop.permute.xlu0 %1685
    %v1688 = vmul.f32 %v1667, %v1686
    %1690 = vrot.lane.b32.xlu0 %v1688, 32
    %v1691 = vpop.permute.xlu0 %1690
    %v1692 = vsel %vm134, %v1691, 0
    %1694 = vmatprep.subr.mxu0 0.0
    %1695 = vmatpush1.msra.mxu0 0.0
    %1696 = vmatprep.subr.mxu0 0.0
    %1697 = vmatpush1.msra.mxu0 0.0
    %1698 = vmatprep.subr.mxu0 0.0
    %1699 = vmatpush1.msra.mxu0 0.0
    %1700 = vmatprep.subr.mxu0 0.0
    %1701 = vmatpush1.msra.mxu0 0.0
    %1702 = vmatprep.subr.mxu0 0.0
    %1703 = vmatpush1.msra.mxu0 0.0
    %1704 = vmatprep.subr.mxu0 0.0
    %1705 = vmatpush1.msra.mxu0 0.0
    %1706 = vmatprep.subr.mxu0 0.0
    %1707 = vmatpush1.msra.mxu0 0.0
    %1708 = vmatprep.subr.mxu0 0.0
    %1709 = vmatpush1.msra.mxu0 0.0
    %1710 = vmatprep.subr.mxu0 0.0
    %1711 = vmatpush1.msra.mxu0 0.0
    %1712 = vmatprep.subr.mxu0 0.0
    %1713 = vmatpush1.msra.mxu0 0.0
    %1714 = vmatprep.subr.mxu0 0.0
    %1715 = vmatpush1.msra.mxu0 0.0
    %1716 = vmatprep.subr.mxu0 0.0
    %1717 = vmatpush1.msra.mxu0 0.0
    %1718 = vmatprep.subr.mxu0 0.0
    %1719 = vmatpush1.msra.mxu0 %v1076
    %1720 = vmatprep.subr.mxu0 0.0
    %1721 = vmatpush1.msra.mxu0 %v1075
    %1722 = vmatprep.subr.mxu0 0.0
    %1723 = vmatpush1.msra.mxu0 %v1074
    %1724 = vmatprep.subr.mxu0 0.0
    %1725 = vmatpush1.msra.mxu0 %v1073
    %1726 = vmatprep.subr.mxu0 0.0
    %1727 = vmatpush2.msra.mxu0 0.0
    %1728 = vmatprep.subr.mxu0 0.0
    %1729 = vmatpush2.msra.mxu0 0.0
    %1730 = vmatprep.subr.mxu0 0.0
    %1731 = vmatpush2.msra.mxu0 0.0
    %1732 = vmatprep.subr.mxu0 0.0
    %1733 = vmatpush2.msra.mxu0 0.0
    %1734 = vmatprep.subr.mxu0 0.0
    %1735 = vmatpush2.msra.mxu0 0.0
    %1736 = vmatprep.subr.mxu0 0.0
    %1737 = vmatpush2.msra.mxu0 0.0
    %1738 = vmatprep.subr.mxu0 0.0
    %1739 = vmatpush2.msra.mxu0 0.0
    %1740 = vmatprep.subr.mxu0 0.0
    %1741 = vmatpush2.msra.mxu0 0.0
    %1742 = vmatprep.subr.mxu0 0.0
    %1743 = vmatpush2.msra.mxu0 0.0
    %1744 = vmatprep.subr.mxu0 0.0
    %1745 = vmatpush2.msra.mxu0 0.0
    %1746 = vmatprep.subr.mxu0 0.0
    %1747 = vmatpush2.msra.mxu0 0.0
    %1748 = vmatprep.subr.mxu0 0.0
    %1749 = vmatpush2.msra.mxu0 0.0
    %1750 = vmatprep.subr.mxu0 0.0
    %1751 = vmatpush2.msra.mxu0 0.0
    %1752 = vmatprep.subr.mxu0 0.0
    %1753 = vmatpush2.msra.mxu0 0.0
    %1754 = vmatprep.subr.mxu0 0.0
    %1755 = vmatpush2.msra.mxu0 0.0
    %1756 = vmatprep.subr.mxu0 0.0
    %1757 = vmatpush2.msra.mxu0 0.0
    %1758 = vmatprep.mubr.f32.mxu0 0.0
    %1759 = vmatmul.mubr.f32.gmra.mxu0 %v1692
    %v1760 = vpop.f32.mrf.mxu0
    %v1761 = vadd.f32 0.0, %v1760
    %v1762 = vpop.f32.mrf.mxu0
    %1763 = vdwg.mxu0
    %v1765 = vrot.slane %v1761, 6
    %v1767 = vadd.f32 %v1167, %v1765
    %v1768 = vxor.u32 %v1767, 2147483648
    %v1769 = vmul.f32 %v1768, 1.442695
    %v1770 = vpow.pop %v1769
    %v1771 = vadd.f32 %v1770, 1.0
    %v1772 = vrcp.pop %v1771
    %v1773 = vmul.f32 1.0, %v1772
    %v1774 = vtanh.pop %v1767
    %v1776 = vrot.slane %v1682, 6
    %v1778 = vmul.f32 %v1773, %v1776
    %1780 = vrot.lane.b32.xlu0 %v1774, 64
    %v1781 = vpop.permute.xlu0 %1780
    %v1783 = vmul.f32 %v1773, %v1781
    %1785 = vrot.lane.b32.xlu0 %v1783, 32
    %v1786 = vpop.permute.xlu0 %1785
    %v1788 = vadd.f32 %v1778, %v1786
    %v1789 = vtanh.pop %v1788
    %1791 = vrot.lane.b32.xlu0 %v1789, 64
    %v1792 = vpop.permute.xlu0 %1791
    %v1794 = vmul.f32 %v1773, %v1792
    %v1796 = vrot.slane %v1794, 2
    %1797 = vrot.lane.b32.xlu0 %v1796, 32
    %v1798 = vpop.permute.xlu0 %1797
    %v1799 = vsel %vm134, %v1798, 0
    %1801 = vmatprep.subr.mxu0 0.0
    %1802 = vmatpush1.msra.mxu0 0.0
    %1803 = vmatprep.subr.mxu0 0.0
    %1804 = vmatpush1.msra.mxu0 0.0
    %1805 = vmatprep.subr.mxu0 0.0
    %1806 = vmatpush1.msra.mxu0 0.0
    %1807 = vmatprep.subr.mxu0 0.0
    %1808 = vmatpush1.msra.mxu0 0.0
    %1809 = vmatprep.subr.mxu0 0.0
    %1810 = vmatpush1.msra.mxu0 0.0
    %1811 = vmatprep.subr.mxu0 0.0
    %1812 = vmatpush1.msra.mxu0 0.0
    %1813 = vmatprep.subr.mxu0 0.0
    %1814 = vmatpush1.msra.mxu0 0.0
    %1815 = vmatprep.subr.mxu0 0.0
    %1816 = vmatpush1.msra.mxu0 0.0
    %1817 = vmatprep.subr.mxu0 0.0
    %1818 = vmatpush1.msra.mxu0 0.0
    %1819 = vmatprep.subr.mxu0 0.0
    %1820 = vmatpush1.msra.mxu0 0.0
    %1821 = vmatprep.subr.mxu0 0.0
    %1822 = vmatpush1.msra.mxu0 0.0
    %1823 = vmatprep.subr.mxu0 0.0
    %1824 = vmatpush1.msra.mxu0 0.0
    %1825 = vmatprep.subr.mxu0 0.0
    %1826 = vmatpush1.msra.mxu0 %v1076
    %1827 = vmatprep.subr.mxu0 0.0
    %1828 = vmatpush1.msra.mxu0 %v1075
    %1829 = vmatprep.subr.mxu0 0.0
    %1830 = vmatpush1.msra.mxu0 %v1074
    %1831 = vmatprep.subr.mxu0 0.0
    %1832 = vmatpush1.msra.mxu0 %v1073
    %1833 = vmatprep.subr.mxu0 0.0
    %1834 = vmatpush2.msra.mxu0 0.0
    %1835 = vmatprep.subr.mxu0 0.0
    %1836 = vmatpush2.msra.mxu0 0.0
    %1837 = vmatprep.subr.mxu0 0.0
    %1838 = vmatpush2.msra.mxu0 0.0
    %1839 = vmatprep.subr.mxu0 0.0
    %1840 = vmatpush2.msra.mxu0 0.0
    %1841 = vmatprep.subr.mxu0 0.0
    %1842 = vmatpush2.msra.mxu0 0.0
    %1843 = vmatprep.subr.mxu0 0.0
    %1844 = vmatpush2.msra.mxu0 0.0
    %1845 = vmatprep.subr.mxu0 0.0
    %1846 = vmatpush2.msra.mxu0 0.0
    %1847 = vmatprep.subr.mxu0 0.0
    %1848 = vmatpush2.msra.mxu0 0.0
    %1849 = vmatprep.subr.mxu0 0.0
    %1850 = vmatpush2.msra.mxu0 0.0
    %1851 = vmatprep.subr.mxu0 0.0
    %1852 = vmatpush2.msra.mxu0 0.0
    %1853 = vmatprep.subr.mxu0 0.0
    %1854 = vmatpush2.msra.mxu0 0.0
    %1855 = vmatprep.subr.mxu0 0.0
    %1856 = vmatpush2.msra.mxu0 0.0
    %1857 = vmatprep.subr.mxu0 0.0
    %1858 = vmatpush2.msra.mxu0 0.0
    %1859 = vmatprep.subr.mxu0 0.0
    %1860 = vmatpush2.msra.mxu0 0.0
    %1861 = vmatprep.subr.mxu0 0.0
    %1862 = vmatpush2.msra.mxu0 0.0
    %1863 = vmatprep.subr.mxu0 0.0
    %1864 = vmatpush2.msra.mxu0 0.0
    %1865 = vmatprep.mubr.f32.mxu0 0.0
    %1866 = vmatmul.mubr.f32.gmra.mxu0 %v1799
    %v1867 = vpop.f32.mrf.mxu0
    %v1868 = vadd.f32 0.0, %v1867
    %v1869 = vpop.f32.mrf.mxu0
    %1870 = vdwg.mxu0
    %v1872 = vrot.slane %v1868, 4
    %v1874 = vadd.f32 %v1167, %v1872
    %v1875 = vxor.u32 %v1874, 2147483648
    %v1876 = vmul.f32 %v1875, 1.442695
    %v1877 = vpow.pop %v1876
    %v1878 = vadd.f32 %v1877, 1.0
    %v1879 = vrcp.pop %v1878
    %v1880 = vmul.f32 1.0, %v1879
    %v1881 = vtanh.pop %v1874
    %v1883 = vrot.slane %v1788, 6
    %v1885 = vmul.f32 %v1880, %v1883
    %1887 = vrot.lane.b32.xlu0 %v1881, 64
    %v1888 = vpop.permute.xlu0 %1887
    %v1890 = vmul.f32 %v1880, %v1888
    %1892 = vrot.lane.b32.xlu0 %v1890, 32
    %v1893 = vpop.permute.xlu0 %1892
    %v1895 = vadd.f32 %v1885, %v1893
    %v1896 = vtanh.pop %v1895
    %1898 = vrot.lane.b32.xlu0 %v1896, 64
    %v1899 = vpop.permute.xlu0 %1898
    %v1901 = vmul.f32 %v1880, %v1899
    %v1903 = vrot.slane %v1901, 4
    %1904 = vrot.lane.b32.xlu0 %v1903, 32
    %v1905 = vpop.permute.xlu0 %1904
    %v1906 = vsel %vm134, %v1905, 0
    %1908 = vmatprep.subr.mxu0 0.0
    %1909 = vmatpush1.msra.mxu0 0.0
    %1910 = vmatprep.subr.mxu0 0.0
    %1911 = vmatpush1.msra.mxu0 0.0
    %1912 = vmatprep.subr.mxu0 0.0
    %1913 = vmatpush1.msra.mxu0 0.0
    %1914 = vmatprep.subr.mxu0 0.0
    %1915 = vmatpush1.msra.mxu0 0.0
    %1916 = vmatprep.subr.mxu0 0.0
    %1917 = vmatpush1.msra.mxu0 0.0
    %1918 = vmatprep.subr.mxu0 0.0
    %1919 = vmatpush1.msra.mxu0 0.0
    %1920 = vmatprep.subr.mxu0 0.0
    %1921 = vmatpush1.msra.mxu0 0.0
    %1922 = vmatprep.subr.mxu0 0.0
    %1923 = vmatpush1.msra.mxu0 0.0
    %1924 = vmatprep.subr.mxu0 0.0
    %1925 = vmatpush1.msra.mxu0 0.0
    %1926 = vmatprep.subr.mxu0 0.0
    %1927 = vmatpush1.msra.mxu0 0.0
    %1928 = vmatprep.subr.mxu0 0.0
    %1929 = vmatpush1.msra.mxu0 0.0
    %1930 = vmatprep.subr.mxu0 0.0
    %1931 = vmatpush1.msra.mxu0 0.0
    %1932 = vmatprep.subr.mxu0 0.0
    %1933 = vmatpush1.msra.mxu0 %v1076
    %1934 = vmatprep.subr.mxu0 0.0
    %1935 = vmatpush1.msra.mxu0 %v1075
    %1936 = vmatprep.subr.mxu0 0.0
    %1937 = vmatpush1.msra.mxu0 %v1074
    %1938 = vmatprep.subr.mxu0 0.0
    %1939 = vmatpush1.msra.mxu0 %v1073
    %1940 = vmatprep.subr.mxu0 0.0
    %1941 = vmatpush2.msra.mxu0 0.0
    %1942 = vmatprep.subr.mxu0 0.0
    %1943 = vmatpush2.msra.mxu0 0.0
    %1944 = vmatprep.subr.mxu0 0.0
    %1945 = vmatpush2.msra.mxu0 0.0
    %1946 = vmatprep.subr.mxu0 0.0
    %1947 = vmatpush2.msra.mxu0 0.0
    %1948 = vmatprep.subr.mxu0 0.0
    %1949 = vmatpush2.msra.mxu0 0.0
    %1950 = vmatprep.subr.mxu0 0.0
    %1951 = vmatpush2.msra.mxu0 0.0
    %1952 = vmatprep.subr.mxu0 0.0
    %1953 = vmatpush2.msra.mxu0 0.0
    %1954 = vmatprep.subr.mxu0 0.0
    %1955 = vmatpush2.msra.mxu0 0.0
    %1956 = vmatprep.subr.mxu0 0.0
    %1957 = vmatpush2.msra.mxu0 0.0
    %1958 = vmatprep.subr.mxu0 0.0
    %1959 = vmatpush2.msra.mxu0 0.0
    %1960 = vmatprep.subr.mxu0 0.0
    %1961 = vmatpush2.msra.mxu0 0.0
    %1962 = vmatprep.subr.mxu0 0.0
    %1963 = vmatpush2.msra.mxu0 0.0
    %1964 = vmatprep.subr.mxu0 0.0
    %1965 = vmatpush2.msra.mxu0 0.0
    %1966 = vmatprep.subr.mxu0 0.0
    %1967 = vmatpush2.msra.mxu0 0.0
    %1968 = vmatprep.subr.mxu0 0.0
    %1969 = vmatpush2.msra.mxu0 0.0
    %1970 = vmatprep.subr.mxu0 0.0
    %1971 = vmatpush2.msra.mxu0 0.0
    %1972 = vmatprep.mubr.f32.mxu0 0.0
    %1973 = vmatmul.mubr.f32.gmra.mxu0 %v1906
    %v1974 = vpop.f32.mrf.mxu0
    %v1975 = vadd.f32 0.0, %v1974
    %v1976 = vpop.f32.mrf.mxu0
    %1977 = vdwg.mxu0
    %v1979 = vrot.slane %v1975, 2
    %v1981 = vadd.f32 %v1167, %v1979
    %v1982 = vxor.u32 %v1981, 2147483648
    %v1983 = vmul.f32 %v1982, 1.442695
    %v1984 = vpow.pop %v1983
    %v1985 = vadd.f32 %v1984, 1.0
    %v1986 = vrcp.pop %v1985
    %v1987 = vmul.f32 1.0, %v1986
    %v1988 = vtanh.pop %v1981
    %v1990 = vrot.slane %v1895, 6
    %v1992 = vmul.f32 %v1987, %v1990
    %1994 = vrot.lane.b32.xlu0 %v1988, 64
    %v1995 = vpop.permute.xlu0 %1994
    %v1997 = vmul.f32 %v1987, %v1995
    %1999 = vrot.lane.b32.xlu0 %v1997, 32
    %v2000 = vpop.permute.xlu0 %1999
    %v2002 = vadd.f32 %v1992, %v2000
    %v2003 = vtanh.pop %v2002
    %2005 = vrot.lane.b32.xlu0 %v2003, 64
    %v2006 = vpop.permute.xlu0 %2005
    %v2008 = vmul.f32 %v1987, %v2006
    %v2009 = vld [vmem:[#allocation8] sm:$0x1]
    %v2011 = vlaneseq
    %v2012 = vshrl.u32 %v2011, 7
    %v2013 = vsub.s32 0, %v2012
    %v2014 = vrot.slane %v2009, %v2013
    %2015 = vrot.lane.b32.xlu0 %v2014, 96
    %v2016 = vpop.permute.xlu0 %2015
    %v2018 = vmul.f32 %v1264, %v2016
    %2020 = vrot.lane.b32.xlu0 %v2018, 32
    %v2021 = vpop.permute.xlu0 %2020
    %vm2023 = vcmask 254976
    %v2024 = vsel %vm2023, %v2021, 0.0
    %2025 = vadd.xlane.f32.xlu0 %v2024
    %v2026 = vpop.xlane.xlu0 %2025
    %v2027 = vmul.f32 %v1370, %v2016
    %2029 = vrot.lane.b32.xlu0 %v2027, 32
    %v2030 = vpop.permute.xlu0 %2029
    %vm2032 = vcmask 257026
    %v2033 = vsel %vm2032, %v2030, 0.0
    %2034 = vadd.xlane.f32.xlu0 %v2033
    %v2035 = vpop.xlane.xlu0 %2034
    %v2036 = vmul.f32 %v1477, %v2016
    %2038 = vrot.lane.b32.xlu0 %v2036, 32
    %v2039 = vpop.permute.xlu0 %2038
    %vm2041 = vcmask 259076
    %v2042 = vsel %vm2041, %v2039, 0.0
    %2043 = vadd.xlane.f32.xlu0 %v2042
    %v2044 = vpop.xlane.xlu0 %2043
    %v2045 = vmul.f32 %v1584, %v2016
    %2047 = vrot.lane.b32.xlu0 %v2045, 32
    %v2048 = vpop.permute.xlu0 %2047
    %vm2050 = vcmask 261126
    %v2051 = vsel %vm2050, %v2048, 0.0
    %2052 = vadd.xlane.f32.xlu0 %v2051
    %v2053 = vpop.xlane.xlu0 %2052
    %v2054 = vmul.f32 %v1688, %v2016
    %2056 = vrot.lane.b32.xlu0 %v2054, 32
    %v2057 = vpop.permute.xlu0 %2056
    %v2059 = vsel %vm2023, %v2057, 0.0
    %2060 = vadd.xlane.f32.xlu0 %v2059
    %v2061 = vpop.xlane.xlu0 %2060
    %v2062 = vmul.f32 %v1794, %v2016
    %2064 = vrot.lane.b32.xlu0 %v2062, 32
    %v2065 = vpop.permute.xlu0 %2064
    %v2067 = vsel %vm2032, %v2065, 0.0
    %2068 = vadd.xlane.f32.xlu0 %v2067
    %v2069 = vpop.xlane.xlu0 %2068
    %v2070 = vmul.f32 %v1901, %v2016
    %2072 = vrot.lane.b32.xlu0 %v2070, 32
    %v2073 = vpop.permute.xlu0 %2072
    %v2075 = vsel %vm2041, %v2073, 0.0
    %2076 = vadd.xlane.f32.xlu0 %v2075
    %v2077 = vpop.xlane.xlu0 %2076
    %v2078 = vmul.f32 %v2008, %v2016
    %2080 = vrot.lane.b32.xlu0 %v2078, 32
    %v2081 = vpop.permute.xlu0 %2080
    %v2083 = vsel %vm2050, %v2081, 0.0
    %2084 = vadd.xlane.f32.xlu0 %v2083
    %v2085 = vpop.xlane.xlu0 %2084
    %v2087 = vrot.slane %v2035, 2
    %v2090 = vrot.slane %v2044, 4
    %v2093 = vrot.slane %v2053, 6
    %v2096 = vrot.slane %v2069, 2
    %v2099 = vrot.slane %v2077, 4
    %v2102 = vrot.slane %v2085, 6
    %vm2104 = vcmask 7168
    %v2105 = vsel %vm2104, %v2026, %v2087
    %vm2106 = vcmask 15360
    %v2107 = vsel %vm2106, %v2105, %v2090
    %vm2108 = vcmask 23552
    %v2109 = vsel %vm2108, %v2107, %v2093
    %vm2110 = vcmask 31744
    %v2111 = vsel %vm2110, %v2109, %v2061
    %vm2112 = vcmask 39936
    %v2113 = vsel %vm2112, %v2111, %v2096
    %vm2114 = vcmask 48128
    %v2115 = vsel %vm2114, %v2113, %v2099
    %vm2116 = vcmask 56320
    %v2117 = vsel %vm2116, %v2115, %v2102
    %v2118 = vld [vmem:[#allocation2] sm:$0x1]
    %v2120 = vlaneseq
    %v2121 = vshrl.u32 %v2120, 7
    %v2122 = vsub.s32 0, %v2121
    %v2123 = vrot.slane %v2118, %v2122
    %2124 = vset.pattern.permute.xlu0 0
    %2125 = vperm.xlu0 %2124, %v2123
    %v2126 = vpop.permute.xlu0 %2125
    %v2128 = vadd.f32 %v2117, %v2126
    %v2129 = vld [vmem:[%s8] sm:$0xff]
    %v2130 = vld [vmem:[#allocation9] sm:$0x1]
    %v2132 = vlaneseq
    %v2133 = vshrl.u32 %v2132, 7
    %v2134 = vsub.s32 0, %v2133
    %v2135 = vrot.slane %v2130, %v2134
    %vm2137 = vcmask 64512
    %v2139 = vsel %vm2137, %v2128, 0
    %2141 = vmatprep.subr.mxu0 0.0
    %2142 = vmatpush1.msra.mxu0 0.0
    %2143 = vmatprep.subr.mxu0 0.0
    %2144 = vmatpush1.msra.mxu0 0.0
    %2145 = vmatprep.subr.mxu0 0.0
    %2146 = vmatpush1.msra.mxu0 0.0
    %2147 = vmatprep.subr.mxu0 0.0
    %2148 = vmatpush1.msra.mxu0 0.0
    %2149 = vmatprep.subr.mxu0 0.0
    %2150 = vmatpush1.msra.mxu0 0.0
    %2151 = vmatprep.subr.mxu0 0.0
    %2152 = vmatpush1.msra.mxu0 0.0
    %2153 = vmatprep.subr.mxu0 0.0
    %2154 = vmatpush1.msra.mxu0 0.0
    %2155 = vmatprep.subr.mxu0 0.0
    %2156 = vmatpush1.msra.mxu0 0.0
    %2157 = vmatprep.subr.mxu0 0.0
    %2158 = vmatpush1.msra.mxu0 0.0
    %2159 = vmatprep.subr.mxu0 0.0
    %2160 = vmatpush1.msra.mxu0 0.0
    %2161 = vmatprep.subr.mxu0 0.0
    %2162 = vmatpush1.msra.mxu0 0.0
    %2163 = vmatprep.subr.mxu0 0.0
    %2164 = vmatpush1.msra.mxu0 0.0
    %2165 = vmatprep.subr.mxu0 0.0
    %2166 = vmatpush1.msra.mxu0 0.0
    %2167 = vmatprep.subr.mxu0 0.0
    %2168 = vmatpush1.msra.mxu0 0.0
    %2169 = vmatprep.subr.mxu0 0.0
    %2170 = vmatpush1.msra.mxu0 0.0
    %2171 = vmatprep.subr.mxu0 0.0
    %2172 = vmatpush1.msra.mxu0 %v2129
    %2173 = vmatprep.subr.mxu0 0.0
    %2174 = vmatpush2.msra.mxu0 0.0
    %2175 = vmatprep.subr.mxu0 0.0
    %2176 = vmatpush2.msra.mxu0 0.0
    %2177 = vmatprep.subr.mxu0 0.0
    %2178 = vmatpush2.msra.mxu0 0.0
    %2179 = vmatprep.subr.mxu0 0.0
    %2180 = vmatpush2.msra.mxu0 0.0
    %2181 = vmatprep.subr.mxu0 0.0
    %2182 = vmatpush2.msra.mxu0 0.0
    %2183 = vmatprep.subr.mxu0 0.0
    %2184 = vmatpush2.msra.mxu0 0.0
    %2185 = vmatprep.subr.mxu0 0.0
    %2186 = vmatpush2.msra.mxu0 0.0
    %2187 = vmatprep.subr.mxu0 0.0
    %2188 = vmatpush2.msra.mxu0 0.0
    %2189 = vmatprep.subr.mxu0 0.0
    %2190 = vmatpush2.msra.mxu0 0.0
    %2191 = vmatprep.subr.mxu0 0.0
    %2192 = vmatpush2.msra.mxu0 0.0
    %2193 = vmatprep.subr.mxu0 0.0
    %2194 = vmatpush2.msra.mxu0 0.0
    %2195 = vmatprep.subr.mxu0 0.0
    %2196 = vmatpush2.msra.mxu0 0.0
    %2197 = vmatprep.subr.mxu0 0.0
    %2198 = vmatpush2.msra.mxu0 0.0
    %2199 = vmatprep.subr.mxu0 0.0
    %2200 = vmatpush2.msra.mxu0 0.0
    %2201 = vmatprep.subr.mxu0 0.0
    %2202 = vmatpush2.msra.mxu0 0.0
    %2203 = vmatprep.subr.mxu0 0.0
    %2204 = vmatpush2.msra.mxu0 0.0
    %2205 = vmatprep.mubr.f32.mxu0 0.0
    %2206 = vmatmul.mubr.f32.gmra.mxu0 %v2139
    %v2207 = vpop.f32.mrf.mxu0
    %v2208 = vadd.f32 %v2135, %v2207
    %v2209 = vpop.f32.mrf.mxu0
    %2210 = vdwg.mxu0
    %vm2211 = vcmask 25600
    %2212 = vst.msk [vmem:[#allocation11] sm:$0x3] %vm2211, %v2208
    // Predicated region
    $region58: #{contrast_rnn_forward.1} parent=1 // pred_check
      _
    $region59: #{contrast_rnn_forward.1} parent=1 // pred_check_branch
      %2214 = sbr.rel (0) target = $region61
    $region60: #{contrast_rnn_forward.1} parent=1 // pred_region
      %s2216 = ssub.s32 32, 32
      %2217 = vsyncadd [#allocation5], %s2216
      %s2219 = sshll.u32 [#allocation11], 4
      %s2220 = int_to_ptr.vmem [resolvable:$true] %s2219
      %2222 = dma.vmem_to_hbm [thread:$0]  %s2220, 32, %s10, [#allocation5]
    $region61: #{contrast_rnn_forward.1} parent=1 // pred_fallthru
      _
    // Predicated region
    $region62: #{contrast_rnn_forward.1} parent=1 // pred_check
      _
    $region63: #{contrast_rnn_forward.1} parent=1 // pred_check_branch
      %2224 = sbr.rel (0) target = $region65
    $region64: #{contrast_rnn_forward.1} parent=1 // pred_region
      %2225 = dma.done [#allocation5], 32
    $region65: #{contrast_rnn_forward.1} parent=1 // pred_fallthru
      _
    %2226 = vsyncpa [#allocation4], 1
    %2227 = vsyncpa [#allocation7], 1
    %2228 = vsyncpa [#allocation10], 1
    %2229 = vsyncpa [#allocation5], 1

</llo_original>
